<compile_context>
chip_gen: v7x
topology: tpu7x:2x2x1
jax: 0.10.0
libtpu: 0.0.40
codegen_flags: <defaults>
</compile_context>

<pallas_src>
import functools

import jax
import jax.numpy as jnp
from jax.experimental import pallas as pl
from jax.experimental.pallas import tpu as pltpu


# Vocab tile (lanes). Multiple of 128.  At realistic V (~50k) raise to
# 4096 (v7x, 64 MiB VMEM) or 8192-16384 (v6e, with a bigger vmem_limit_bytes).
VOCAB_TILE = 128


def _round_up(x, m):
    return (x + m - 1) // m * m


def _pack_layout(H, S):
    """128-aligned field slots inside the packed small-output slab."""
    offs = {}
    o = 0
    for name, w in (("h1", H), ("c1", H), ("att_out", H), ("attn", S), ("cov", S)):
        offs[name] = (o, w)
        o += _round_up(w, 128)
    return offs, o


# ------------------------------ fused kernel --------------------------------

def fused_decoder_kernel(
        # scalar prefetch
        ids_ref,
        # inputs (21)
        content_ref, z_ref, h0_ref, c0_ref, ctx_ref, cov_ref,
        emb_hbm,
        wx_ref, wzg_ref, whg_ref, bg_ref,
        awh_ref, aws_ref, awc_ref, av_ref, ab_ref,
        fcw_ref, fcb_ref, pwe_ref, pwz_ref, pb_ref,
        # outputs (2)
        out_ref, small_ref,
        # scratch (5)
        s_emb, s_attout, s_attn, s_p, emb_sem):
    B, S, H = ctx_ref.shape
    E = s_emb.shape[1]
    TN = fcw_ref.shape[1]
    f32 = jnp.float32
    bf16 = jnp.bfloat16
    k = pl.program_id(0)

    # ---------------- k == 0: decoder "head" (LSTM + attention + p gate) ------
    @pl.when(k == 0)
    def _head():
        # DMA-gather only the B needed embedding rows from the HBM table.
        for b in range(B):
            pltpu.make_async_copy(
                emb_hbm.at[pl.ds(ids_ref[b], 1), :],
                s_emb.at[pl.ds(b, 1), :],
                emb_sem.at[b]).start()
        for b in range(B):
            pltpu.make_async_copy(
                emb_hbm.at[pl.ds(ids_ref[b], 1), :],
                s_emb.at[pl.ds(b, 1), :],
                emb_sem.at[b]).wait()

        emb = s_emb[...]                                         # (B,E) f32
        emb_bf = emb.astype(bf16)
        z = z_ref[...]                                           # (B,H) f32
        h0 = h0_ref[...]
        c0 = c0_ref[...]

        # LSTM cell: 3 lane-dense (N = 4H) MXU matmuls + static gate slices.
        gates = (jnp.dot(emb_bf, wx_ref[...], preferred_element_type=f32)
                 + jnp.dot(z.astype(bf16), wzg_ref[...], preferred_element_type=f32)
                 + jnp.dot(h0.astype(bf16), whg_ref[...], preferred_element_type=f32)
                 + bg_ref[...])                                  # (B,4H)
        i_g = jax.nn.sigmoid(gates[:, 0 * H:1 * H])
        f_g = jax.nn.sigmoid(gates[:, 1 * H:2 * H])
        g_g = jnp.tanh(gates[:, 2 * H:3 * H])
        o_g = jax.nn.sigmoid(gates[:, 3 * H:4 * H])
        c1 = f_g * c0 + i_g * g_g
        h1 = o_g * jnp.tanh(c1)

        # Coverage attention (f32 elementwise; bf16 MXU operands).
        ctx = ctx_ref[...]                                       # (B,S,H)
        cov = cov_ref[...]                                       # (B,S)
        f_ctx = jnp.dot(ctx.astype(bf16).reshape(B * S, H), awh_ref[...],
                        preferred_element_type=f32).reshape(B, S, H)
        f_h = jnp.dot(h1.astype(bf16), aws_ref[...],
                      preferred_element_type=f32)                # (B,H)
        e = jnp.tanh(f_ctx + f_h[:, None, :]
                     + cov[:, :, None] * awc_ref[...] + ab_ref[...])
        scores = jnp.sum(e * av_ref[...], axis=-1)               # (B,S)
        m = jnp.max(scores, axis=-1, keepdims=True)
        ex = jnp.exp(scores - m)
        # Exact normalization: coverage accumulates across decode steps.
        attn = ex / jnp.sum(ex, axis=-1, keepdims=True)
        att_out = jnp.sum(attn[:, :, None] * ctx, axis=1)        # (B,H)
        cov_new = cov + attn

        # Pointer gate p = sigmoid([emb, emb, z] . p_w + b)  (emb cols folded).
        p = jax.nn.sigmoid(
            jnp.dot(emb, pwe_ref[...], preferred_element_type=f32)
            + jnp.dot(z, pwz_ref[...], preferred_element_type=f32)
            + pb_ref[...])                                       # (B,1)

        # Park quantities reused by every vocab tile.
        s_attout[...] = att_out
        s_attn[...] = attn
        s_p[...] = p

        # Packed small-output slab (128-aligned field slots, split in wrapper).
        offs, _ = _pack_layout(H, S)
        small_ref[...] = jnp.zeros_like(small_ref)
        o, w = offs["h1"];      small_ref[:, o:o + w] = h1
        o, w = offs["c1"];      small_ref[:, o:o + w] = c1
        o, w = offs["att_out"]; small_ref[:, o:o + w] = att_out
        o, w = offs["attn"];    small_ref[:, o:o + w] = attn
        o, w = offs["cov"];     small_ref[:, o:o + w] = cov_new

    # ---------------- every grid step: one vocab tile --------------------------
    att_out_bf = s_attout[...].astype(bf16)                      # (B,H)
    fc_tile = (jnp.dot(att_out_bf, fcw_ref[...], preferred_element_type=f32)
               + fcb_ref[...])                                   # (B,TN)

    # Per-tile pointer scatter: compare content against this tile's ids only.
    base = k * TN
    content = content_ref[...]                                   # (B,S) int32
    lane_ids = jax.lax.broadcasted_iota(jnp.int32, (B, S, TN), 2) + base
    hit = content[:, :, None] == lane_ids                        # (B,S,TN) tiny
    attn_val = jnp.sum(jnp.where(hit, s_attn[...][:, :, None], 0.0), axis=1)
    # TODO(synk): duplicate source ids in `content` get scatter-ADD here; torch
    # scatter_ picks an arbitrary writer for duplicates (undefined), so ADD is
    # an accepted choice.

    p = s_p[...]                                                 # (B,1)
    out_ref[...] = (1.0 - p) * fc_tile + p * attn_val


# ---------------------------- pallas_call wrapper ----------------------------

def fused_decoder_step(ids, content, z2, h0, c0, ctx, coverage, kp):
    B, S, H = ctx.shape
    V, E = kp['emb'].shape
    Vp = kp['fc_w'].shape[1]
    tn = VOCAB_TILE
    assert Vp % tn == 0
    n_tiles = Vp // tn
    offs, p_small = _pack_layout(H, S)

    def full(shape):
        zeros = (0,) * len(shape)
        return pl.BlockSpec(shape, lambda k, ids_ref: zeros)

    grid_spec = pltpu.PrefetchScalarGridSpec(
        num_scalar_prefetch=1,               # ids -> SMEM, used for the DMA gather
        grid=(n_tiles,),
        in_specs=[
            full(content.shape), full(z2.shape), full(h0.shape), full(c0.shape),
            full(ctx.shape), full(coverage.shape),
            pl.BlockSpec(memory_space=pl.ANY),                   # emb table stays in HBM
            full(kp['w_x'].shape), full(kp['w_z'].shape), full(kp['w_h'].shape),
            full(kp['b_g'].shape),
            full(kp['att_wh'].shape), full(kp['att_ws'].shape), full(kp['att_wc'].shape),
            full(kp['att_v'].shape), full(kp['att_b'].shape),
            pl.BlockSpec((H, tn), lambda k, ids_ref: (0, k)),    # fc_w streamed per tile
            pl.BlockSpec((1, tn), lambda k, ids_ref: (0, k)),    # fc_b
            full(kp['p_we'].shape), full(kp['p_wz'].shape), full(kp['p_b'].shape),
        ],
        out_specs=[
            pl.BlockSpec((B, tn), lambda k, ids_ref: (0, k)),    # mixed vocab dist tile
            pl.BlockSpec((B, p_small), lambda k, ids_ref: (0, 0)),  # packed small slab
        ],
        scratch_shapes=[
            pltpu.VMEM((B, E), jnp.float32),    # gathered embedding rows
            pltpu.VMEM((B, H), jnp.float32),    # att_out
            pltpu.VMEM((B, S), jnp.float32),    # attn
            pltpu.VMEM((B, 1), jnp.float32),    # p gate
            pltpu.SemaphoreType.DMA((B,)),      # embedding-gather DMAs
        ],
    )

    out_shapes = (
        jax.ShapeDtypeStruct((B, Vp), jnp.float32),      # mixed vocab dist (padded)
        jax.ShapeDtypeStruct((B, p_small), jnp.float32),  # packed h1|c1|att_out|attn|cov
    )

    # Advisory cost estimate (mem-bound fc_w stream + small head).
    flops = int(2 * B * H * Vp + 2 * B * (E + 2 * H) * 4 * H + 4 * B * S * H * H)
    bytes_accessed = int(H * Vp * 2 + B * E * 4 + B * S * H * 4
                         + B * Vp * 4 + B * p_small * 4)
    cost = pl.CostEstimate(flops=flops,
                           transcendentals=int(B * (S * H + 5 * H + 2 * S)),
                           bytes_accessed=bytes_accessed)

    out_p, small = pl.pallas_call(
        fused_decoder_kernel,
        out_shape=out_shapes,
        grid_spec=grid_spec,
        compiler_params=pltpu.CompilerParams(
            # The vocab axis carries the k==0 head state in scratch -> "arbitrary".
            # TODO(synk): recompute the head per tile to allow "parallel" on v7x (2 TCs).
            dimension_semantics=("arbitrary",),
            vmem_limit_bytes=32 * 1024 * 1024,
        ),
        cost_estimate=cost,
    )(ids, content, z2, h0, c0, ctx, coverage,
      kp['emb'], kp['w_x'], kp['w_z'], kp['w_h'], kp['b_g'],
      kp['att_wh'], kp['att_ws'], kp['att_wc'], kp['att_v'], kp['att_b'],
      kp['fc_w'], kp['fc_b'], kp['p_we'], kp['p_wz'], kp['p_b'])

    def field(name):
        o, w = offs[name]
        return small[:, o:o + w]

    return (out_p, field("h1"), field("c1"), field("att_out"),
            field("attn"), field("cov"))


# ------------------------------- parameters ---------------------------------

def init_params(key, num_words, embedding_dim, hidden_size):
    V, E, H = num_words, embedding_dim, hidden_size
    ks = jax.random.split(key, 14)
    s = 0.1
    return {
        'embedding': jax.random.normal(ks[0], (V, E), jnp.float32) * s,
        # LSTM (matmul layout; gate order i,f,g,o along columns)
        'w_ih': jax.random.normal(ks[1], (E + H, 4 * H), jnp.float32) * s,
        'w_hh': jax.random.normal(ks[2], (H, 4 * H), jnp.float32) * s,
        'b_lstm': jax.random.normal(ks[3], (1, 4 * H), jnp.float32) * s,  # b_ih+b_hh
        # coverage attention (attention dim A = H)
        'att_wh': jax.random.normal(ks[4], (H, H), jnp.float32) * s,
        'att_ws': jax.random.normal(ks[5], (H, H), jnp.float32) * s,
        'att_wc': jax.random.normal(ks[6], (1, H), jnp.float32) * s,
        'att_v': jax.random.normal(ks[7], (1, H), jnp.float32) * s,
        'att_b': jax.random.normal(ks[8], (1, H), jnp.float32) * s,
        # fc: hidden -> vocab
        'fc_w': jax.random.normal(ks[9], (H, V), jnp.float32) * s,
        'fc_b': jax.random.normal(ks[10], (1, V), jnp.float32) * s,
        # p gate: (2E + H) -> 1
        'p_w': jax.random.normal(ks[11], (2 * E + H, 1), jnp.float32) * s,
        'p_b': jax.random.normal(ks[12], (1, 1), jnp.float32) * s,
    }


def prepare_kernel_params(params):
    """Offline (one-time) repack: fused gate weights, fold p_w, pad V, cast bf16."""
    V, E = params['embedding'].shape
    H = params['w_hh'].shape[0]
    Vp = _round_up(V, VOCAB_TILE)
    bf = jnp.bfloat16

    w_ih = params['w_ih']                                         # (E+H, 4H)
    fcw_p = jnp.zeros((H, Vp), jnp.float32).at[:, :V].set(params['fc_w'])
    fcb_p = jnp.zeros((1, Vp), jnp.float32).at[:, :V].set(params['fc_b'])

    p_w = params['p_w']                                           # (2E+H, 1)
    p_we = p_w[:E] + p_w[E:2 * E]      # fold duplicated embedding columns
    p_wz = p_w[2 * E:]

    return {
        'emb': params['embedding'],            # (V,E) f32 — stays in HBM, DMA-gathered
        'w_x': w_ih[:E].astype(bf),            # (E,4H)
        'w_z': w_ih[E:].astype(bf),            # (H,4H)
        'w_h': params['w_hh'].astype(bf),      # (H,4H)
        'b_g': params['b_lstm'],               # (1,4H) f32
        'att_wh': params['att_wh'].astype(bf),
        'att_ws': params['att_ws'].astype(bf),
        'att_wc': params['att_wc'], 'att_v': params['att_v'], 'att_b': params['att_b'],
        'fc_w': fcw_p.astype(bf), 'fc_b': fcb_p,
        'p_we': p_we, 'p_wz': p_wz, 'p_b': params['p_b'],
    }


# -------------------------------- forward -----------------------------------

@functools.partial(jax.jit, static_argnames=('num_words',))
def attention_decoder_forward(kparams, input_ids, hidden, encoder_output, z,
                              content, coverage, *, num_words):
    h0, c0 = hidden                                     # each (1, B, H)
    ids = input_ids[:, 0].astype(jnp.int32)             # (B,)
    out_p, h1, c1, att_out, attn, coverage_new = fused_decoder_step(
        ids, content, z[:, 0, :], h0[0], c0[0], encoder_output, coverage, kparams)
    out = out_p[:, :num_words]                          # drop lane padding
    hidden_new = (h1[None], c1[None])
    output = att_out[:, None, :]                        # (B,1,H)
    return out, hidden_new, output, attn, coverage_new


# --------------------------- pure-JAX reference ------------------------------

def reference_forward(params, input_ids, hidden, encoder_output, z, content,
                      coverage):
    bf = jnp.bfloat16
    f32 = jnp.float32
    h0, c0 = hidden[0][0], hidden[1][0]
    B, S, H = encoder_output.shape
    V, E = params['embedding'].shape

    emb = jnp.take(params['embedding'], input_ids[:, 0], axis=0)   # (B,E) f32
    z2 = z[:, 0, :]
    x = jnp.concatenate([emb, z2], axis=1)
    gates = (jnp.dot(x.astype(bf), params['w_ih'].astype(bf),
                     preferred_element_type=f32)
             + jnp.dot(h0.astype(bf), params['w_hh'].astype(bf),
                       preferred_element_type=f32)
             + params['b_lstm'])
    i = jax.nn.sigmoid(gates[:, 0 * H:1 * H])
    f = jax.nn.sigmoid(gates[:, 1 * H:2 * H])
    g = jnp.tanh(gates[:, 2 * H:3 * H])
    o = jax.nn.sigmoid(gates[:, 3 * H:4 * H])
    c1 = f * c0 + i * g
    h1 = o * jnp.tanh(c1)

    ctx = encoder_output
    f_ctx = jnp.einsum('bsh,ha->bsa', ctx.astype(bf),
                       params['att_wh'].astype(bf), preferred_element_type=f32)
    f_h = jnp.dot(h1.astype(bf), params['att_ws'].astype(bf),
                  preferred_element_type=f32)
    e = jnp.tanh(f_ctx + f_h[:, None, :]
                 + coverage[:, :, None] * params['att_wc'] + params['att_b'])
    scores = jnp.sum(e * params['att_v'], axis=-1)
    attn = jax.nn.softmax(scores, axis=-1)
    att_out = jnp.sum(attn[:, :, None] * ctx, axis=1)
    cov_new = coverage + attn

    attn_value = jnp.zeros((B, V), f32).at[
        jnp.arange(B)[:, None], content].add(attn)
    fc = jnp.dot(att_out.astype(bf), params['fc_w'].astype(bf),
                 preferred_element_type=f32) + params['fc_b']
    p_in = jnp.concatenate([emb, emb, z2], axis=1)
    p = jax.nn.sigmoid(jnp.dot(p_in, params['p_w']) + params['p_b'])
    out = (1.0 - p) * fc + p * attn_value
    return out, (h1[None], c1[None]), att_out[:, None, :], attn, cov_new


# --------------------------------- main --------------------------------------

if __name__ == "__main__":
    # V=300 -> Vp=384 -> 3 vocab tiles (exercises the vocab grid).
    configure = dict(num_words=300, embedding_dim=16, hidden_size=32, num_layers=1)
    B, S = 2, 8
    V, E, H = configure['num_words'], configure['embedding_dim'], configure['hidden_size']

    key = jax.random.PRNGKey(0)
    kp_, ki, kc, kz, kh, kcell, ke = jax.random.split(key, 7)

    params = init_params(kp_, V, E, H)
    kparams = prepare_kernel_params(params)     # one-time offline repack

    input_ids = jax.random.randint(ki, (B, 1), 0, V, dtype=jnp.int32)
    content = jax.random.randint(kc, (B, S), 0, V, dtype=jnp.int32)
    z = jax.random.normal(kz, (B, 1, H), jnp.float32)
    hidden = (jax.random.normal(kh, (1, B, H), jnp.float32) * 0.1,
              jax.random.normal(kcell, (1, B, H), jnp.float32) * 0.1)
    encoder_output = jax.random.normal(ke, (B, S, H), jnp.float32)
    coverage = jnp.zeros((B, S), jnp.float32)

    out, hidden_new, output, attn, coverage_new = jax.block_until_ready(
        attention_decoder_forward(kparams, input_ids, hidden, encoder_output,
                                  z, content, coverage, num_words=V))

    assert out.shape == (B, V)
    assert hidden_new[0].shape == (1, B, H) and hidden_new[1].shape == (1, B, H)
    assert output.shape == (B, 1, H)
    assert attn.shape == (B, S)
    assert coverage_new.shape == (B, S)
    assert bool(jnp.all(jnp.isfinite(out)))

    # correctness vs. pure-JAX reference (same bf16 MXU-operand policy)
    r_out, r_hidden, r_output, r_attn, r_cov = reference_forward(
        params, input_ids, hidden, encoder_output, z, content, coverage)
    tol = dict(rtol=2e-2, atol=2e-2)
    assert bool(jnp.allclose(out, r_out, **tol))
    assert bool(jnp.allclose(hidden_new[0], r_hidden[0], **tol))
    assert bool(jnp.allclose(hidden_new[1], r_hidden[1], **tol))
    assert bool(jnp.allclose(output, r_output, **tol))
    assert bool(jnp.allclose(attn, r_attn, **tol))
    assert bool(jnp.allclose(coverage_new, r_cov, **tol))

    print("KERNEL_OK")
</pallas_src>

<mosaic_0001>
module attributes {stable_mosaic.version = 11 : i64} {
  func.func @fused_decoder_kernel(%arg0: i32, %arg1: memref<2xi32, #tpu.memory_space<smem>>, %arg2: memref<2x8xi32, #tpu.memory_space<vmem>>, %arg3: memref<2x32xf32, #tpu.memory_space<vmem>>, %arg4: memref<2x32xf32, #tpu.memory_space<vmem>>, %arg5: memref<2x32xf32, #tpu.memory_space<vmem>>, %arg6: memref<2x8x32xf32, #tpu.memory_space<vmem>>, %arg7: memref<2x8xf32, #tpu.memory_space<vmem>>, %arg8: memref<300x16xf32, #tpu.memory_space<any>>, %arg9: memref<16x128xbf16, #tpu.memory_space<vmem>>, %arg10: memref<32x128xbf16, #tpu.memory_space<vmem>>, %arg11: memref<32x128xbf16, #tpu.memory_space<vmem>>, %arg12: memref<1x128xf32, #tpu.memory_space<vmem>>, %arg13: memref<32x32xbf16, #tpu.memory_space<vmem>>, %arg14: memref<32x32xbf16, #tpu.memory_space<vmem>>, %arg15: memref<1x32xf32, #tpu.memory_space<vmem>>, %arg16: memref<1x32xf32, #tpu.memory_space<vmem>>, %arg17: memref<1x32xf32, #tpu.memory_space<vmem>>, %arg18: memref<32x128xbf16, #tpu.memory_space<vmem>>, %arg19: memref<1x128xf32, #tpu.memory_space<vmem>>, %arg20: memref<16x1xf32, #tpu.memory_space<vmem>>, %arg21: memref<32x1xf32, #tpu.memory_space<vmem>>, %arg22: memref<1x1xf32, #tpu.memory_space<vmem>>, %arg23: memref<2x128xf32, #tpu.memory_space<vmem>>, %arg24: memref<2x640xf32, #tpu.memory_space<vmem>>, %arg25: memref<2x16xf32, #tpu.memory_space<vmem>>, %arg26: memref<2x32xf32, #tpu.memory_space<vmem>>, %arg27: memref<2x8xf32, #tpu.memory_space<vmem>>, %arg28: memref<2x1xf32, #tpu.memory_space<vmem>>, %arg29: memref<2x!tpu.dma_semaphore, #tpu.memory_space<semaphore_mem>>) attributes {dimension_semantics = [#tpu.dimension_semantics<arbitrary>], iteration_bounds = array<i64: 3>, scalar_prefetch = 1 : i64, scratch_operands = 5 : i64, tpu.core_type = #tpu.core_type<tc>, window_params = [{pipeline_mode = #tpu.pipeline_mode<synchronous>, transform_indices = @transform_0, window_bounds = array<i64: 2, 8>}, {pipeline_mode = #tpu.pipeline_mode<synchronous>, transform_indices = @transform_1, window_bounds = array<i64: 2, 32>}, {pipeline_mode = #tpu.pipeline_mode<synchronous>, transform_indices = @transform_2, window_bounds = array<i64: 2, 32>}, {pipeline_mode = #tpu.pipeline_mode<synchronous>, transform_indices = @transform_3, window_bounds = array<i64: 2, 32>}, {pipeline_mode = #tpu.pipeline_mode<synchronous>, transform_indices = @transform_4, window_bounds = array<i64: 2, 8, 32>}, {pipeline_mode = #tpu.pipeline_mode<synchronous>, transform_indices = @transform_5, window_bounds = array<i64: 2, 8>}, {}, {pipeline_mode = #tpu.pipeline_mode<synchronous>, transform_indices = @transform_7, window_bounds = array<i64: 16, 128>}, {pipeline_mode = #tpu.pipeline_mode<synchronous>, transform_indices = @transform_8, window_bounds = array<i64: 32, 128>}, {pipeline_mode = #tpu.pipeline_mode<synchronous>, transform_indices = @transform_9, window_bounds = array<i64: 32, 128>}, {pipeline_mode = #tpu.pipeline_mode<synchronous>, transform_indices = @transform_10, window_bounds = array<i64: 1, 128>}, {pipeline_mode = #tpu.pipeline_mode<synchronous>, transform_indices = @transform_11, window_bounds = array<i64: 32, 32>}, {pipeline_mode = #tpu.pipeline_mode<synchronous>, transform_indices = @transform_12, window_bounds = array<i64: 32, 32>}, {pipeline_mode = #tpu.pipeline_mode<synchronous>, transform_indices = @transform_13, window_bounds = array<i64: 1, 32>}, {pipeline_mode = #tpu.pipeline_mode<synchronous>, transform_indices = @transform_14, window_bounds = array<i64: 1, 32>}, {pipeline_mode = #tpu.pipeline_mode<synchronous>, transform_indices = @transform_15, window_bounds = array<i64: 1, 32>}, {transform_indices = @transform_16, window_bounds = array<i64: 32, 128>}, {transform_indices = @transform_17, window_bounds = array<i64: 1, 128>}, {pipeline_mode = #tpu.pipeline_mode<synchronous>, transform_indices = @transform_18, window_bounds = array<i64: 16, 1>}, {pipeline_mode = #tpu.pipeline_mode<synchronous>, transform_indices = @transform_19, window_bounds = array<i64: 32, 1>}, {pipeline_mode = #tpu.pipeline_mode<synchronous>, transform_indices = @transform_20, window_bounds = array<i64: 1, 1>}, {transform_indices = @transform_21, window_bounds = array<i64: 2, 128>}, {pipeline_mode = #tpu.pipeline_mode<synchronous>, transform_indices = @transform_22, window_bounds = array<i64: 2, 640>}]} {
    %c0_i32 = arith.constant 0 : i32
    %0 = arith.cmpi eq, %arg0, %c0_i32 : i32
    %1 = arith.extui %0 : i1 to i32
    %c0_i32_0 = arith.constant 0 : i32
    %2 = arith.cmpi ne, %1, %c0_i32_0 : i32
    scf.if %2 {
      %c0_17 = arith.constant 0 : index
      %34 = memref.load %arg1[%c0_17] : memref<2xi32, #tpu.memory_space<smem>>
      %c0_i32_18 = arith.constant 0 : i32
      %c0_i32_19 = arith.constant 0 : i32
      %35 = tpu.memref_slice %arg8[%34, %c0_i32_19] : memref<300x16xf32, #tpu.memory_space<any>> -> memref<1x16xf32, #tpu.memory_space<any>>
      %c0_i32_20 = arith.constant 0 : i32
      %c0_i32_21 = arith.constant 0 : i32
      %36 = tpu.memref_slice %arg25[%c0_i32_20, %c0_i32_21] : memref<2x16xf32, #tpu.memory_space<vmem>> -> memref<1x16xf32, #tpu.memory_space<vmem>>
      %37 = tpu.memref_slice %arg29[%c0_i32_18] : memref<2x!tpu.dma_semaphore, #tpu.memory_space<semaphore_mem>> -> memref<1x!tpu.dma_semaphore, #tpu.memory_space<semaphore_mem>>
      %38 = tpu.memref_squeeze %37 : memref<1x!tpu.dma_semaphore, #tpu.memory_space<semaphore_mem>> -> memref<!tpu.dma_semaphore, #tpu.memory_space<semaphore_mem>>
      tpu.enqueue_dma source(%35 : memref<1x16xf32, #tpu.memory_space<any>>) target(%36 : memref<1x16xf32, #tpu.memory_space<vmem>>) target_semaphore(%38 : memref<!tpu.dma_semaphore, #tpu.memory_space<semaphore_mem>>)
      %c1 = arith.constant 1 : index
      %39 = memref.load %arg1[%c1] : memref<2xi32, #tpu.memory_space<smem>>
      %c1_i32 = arith.constant 1 : i32
      %c0_i32_22 = arith.constant 0 : i32
      %40 = tpu.memref_slice %arg8[%39, %c0_i32_22] : memref<300x16xf32, #tpu.memory_space<any>> -> memref<1x16xf32, #tpu.memory_space<any>>
      %c1_i32_23 = arith.constant 1 : i32
      %c0_i32_24 = arith.constant 0 : i32
      %41 = tpu.memref_slice %arg25[%c1_i32_23, %c0_i32_24] : memref<2x16xf32, #tpu.memory_space<vmem>> -> memref<1x16xf32, #tpu.memory_space<vmem>>
      %42 = tpu.memref_slice %arg29[%c1_i32] : memref<2x!tpu.dma_semaphore, #tpu.memory_space<semaphore_mem>> -> memref<1x!tpu.dma_semaphore, #tpu.memory_space<semaphore_mem>>
      %43 = tpu.memref_squeeze %42 : memref<1x!tpu.dma_semaphore, #tpu.memory_space<semaphore_mem>> -> memref<!tpu.dma_semaphore, #tpu.memory_space<semaphore_mem>>
      tpu.enqueue_dma source(%40 : memref<1x16xf32, #tpu.memory_space<any>>) target(%41 : memref<1x16xf32, #tpu.memory_space<vmem>>) target_semaphore(%43 : memref<!tpu.dma_semaphore, #tpu.memory_space<semaphore_mem>>)
      %c0_25 = arith.constant 0 : index
      %44 = memref.load %arg1[%c0_25] : memref<2xi32, #tpu.memory_space<smem>>
      %c0_i32_26 = arith.constant 0 : i32
      %c0_i32_27 = arith.constant 0 : i32
      %45 = tpu.memref_slice %arg8[%44, %c0_i32_27] : memref<300x16xf32, #tpu.memory_space<any>> -> memref<1x16xf32, #tpu.memory_space<any>>
      %c0_i32_28 = arith.constant 0 : i32
      %c0_i32_29 = arith.constant 0 : i32
      %46 = tpu.memref_slice %arg25[%c0_i32_28, %c0_i32_29] : memref<2x16xf32, #tpu.memory_space<vmem>> -> memref<1x16xf32, #tpu.memory_space<vmem>>
      %47 = tpu.memref_slice %arg29[%c0_i32_26] : memref<2x!tpu.dma_semaphore, #tpu.memory_space<semaphore_mem>> -> memref<1x!tpu.dma_semaphore, #tpu.memory_space<semaphore_mem>>
      %48 = tpu.memref_squeeze %47 : memref<1x!tpu.dma_semaphore, #tpu.memory_space<semaphore_mem>> -> memref<!tpu.dma_semaphore, #tpu.memory_space<semaphore_mem>>
      tpu.wait_dma2 semaphore(%48 : memref<!tpu.dma_semaphore, #tpu.memory_space<semaphore_mem>>) src(%45 : memref<1x16xf32, #tpu.memory_space<any>>) dst(%46 : memref<1x16xf32, #tpu.memory_space<vmem>>)
      %c1_30 = arith.constant 1 : index
      %49 = memref.load %arg1[%c1_30] : memref<2xi32, #tpu.memory_space<smem>>
      %c1_i32_31 = arith.constant 1 : i32
      %c0_i32_32 = arith.constant 0 : i32
      %50 = tpu.memref_slice %arg8[%49, %c0_i32_32] : memref<300x16xf32, #tpu.memory_space<any>> -> memref<1x16xf32, #tpu.memory_space<any>>
      %c1_i32_33 = arith.constant 1 : i32
      %c0_i32_34 = arith.constant 0 : i32
      %51 = tpu.memref_slice %arg25[%c1_i32_33, %c0_i32_34] : memref<2x16xf32, #tpu.memory_space<vmem>> -> memref<1x16xf32, #tpu.memory_space<vmem>>
      %52 = tpu.memref_slice %arg29[%c1_i32_31] : memref<2x!tpu.dma_semaphore, #tpu.memory_space<semaphore_mem>> -> memref<1x!tpu.dma_semaphore, #tpu.memory_space<semaphore_mem>>
      %53 = tpu.memref_squeeze %52 : memref<1x!tpu.dma_semaphore, #tpu.memory_space<semaphore_mem>> -> memref<!tpu.dma_semaphore, #tpu.memory_space<semaphore_mem>>
      tpu.wait_dma2 semaphore(%53 : memref<!tpu.dma_semaphore, #tpu.memory_space<semaphore_mem>>) src(%50 : memref<1x16xf32, #tpu.memory_space<any>>) dst(%51 : memref<1x16xf32, #tpu.memory_space<vmem>>)
      %c0_35 = arith.constant 0 : index
      %c0_36 = arith.constant 0 : index
      %54 = vector.load %arg25[%c0_35, %c0_36] : memref<2x16xf32, #tpu.memory_space<vmem>>, vector<2x16xf32>
      %55 = arith.truncf %54 : vector<2x16xf32> to vector<2x16xbf16>
      %c0_37 = arith.constant 0 : index
      %c0_38 = arith.constant 0 : index
      %56 = vector.load %arg3[%c0_37, %c0_38] : memref<2x32xf32, #tpu.memory_space<vmem>>, vector<2x32xf32>
      %c0_39 = arith.constant 0 : index
      %c0_40 = arith.constant 0 : index
      %57 = vector.load %arg4[%c0_39, %c0_40] : memref<2x32xf32, #tpu.memory_space<vmem>>, vector<2x32xf32>
      %c0_41 = arith.constant 0 : index
      %c0_42 = arith.constant 0 : index
      %58 = vector.load %arg5[%c0_41, %c0_42] : memref<2x32xf32, #tpu.memory_space<vmem>>, vector<2x32xf32>
      %c0_43 = arith.constant 0 : index
      %c0_44 = arith.constant 0 : index
      %59 = vector.load %arg9[%c0_43, %c0_44] : memref<16x128xbf16, #tpu.memory_space<vmem>>, vector<16x128xbf16>
      %cst_45 = arith.constant dense<0.000000e+00> : vector<2x128xf32>
      %60 = tpu.matmul %55, %59, %cst_45 {dimension_numbers = #tpu.dot_dimension_numbers<[1], [0], [0], [1], [0, 0, 1, 1], [], []>} : vector<2x16xbf16>, vector<16x128xbf16>, vector<2x128xf32> -> vector<2x128xf32>
      %61 = arith.truncf %56 : vector<2x32xf32> to vector<2x32xbf16>
      %c0_46 = arith.constant 0 : index
      %c0_47 = arith.constant 0 : index
      %62 = vector.load %arg10[%c0_46, %c0_47] : memref<32x128xbf16, #tpu.memory_space<vmem>>, vector<32x128xbf16>
      %cst_48 = arith.constant dense<0.000000e+00> : vector<2x128xf32>
      %63 = tpu.matmul %61, %62, %cst_48 {dimension_numbers = #tpu.dot_dimension_numbers<[1], [0], [0], [1], [0, 0, 1, 1], [], []>} : vector<2x32xbf16>, vector<32x128xbf16>, vector<2x128xf32> -> vector<2x128xf32>
      %64 = arith.addf %60, %63 : vector<2x128xf32>
      %65 = arith.truncf %57 : vector<2x32xf32> to vector<2x32xbf16>
      %c0_49 = arith.constant 0 : index
      %c0_50 = arith.constant 0 : index
      %66 = vector.load %arg11[%c0_49, %c0_50] : memref<32x128xbf16, #tpu.memory_space<vmem>>, vector<32x128xbf16>
      %cst_51 = arith.constant dense<0.000000e+00> : vector<2x128xf32>
      %67 = tpu.matmul %65, %66, %cst_51 {dimension_numbers = #tpu.dot_dimension_numbers<[1], [0], [0], [1], [0, 0, 1, 1], [], []>} : vector<2x32xbf16>, vector<32x128xbf16>, vector<2x128xf32> -> vector<2x128xf32>
      %68 = arith.addf %64, %67 : vector<2x128xf32>
      %c0_52 = arith.constant 0 : index
      %c0_53 = arith.constant 0 : index
      %69 = vector.load %arg12[%c0_52, %c0_53] : memref<1x128xf32, #tpu.memory_space<vmem>>, vector<1x128xf32>
      %70 = vector.broadcast %69 : vector<1x128xf32> to vector<2x128xf32>
      %71 = arith.addf %68, %70 : vector<2x128xf32>
      %72 = vector.extract_strided_slice %71 {offsets = [0, 0], sizes = [2, 32], strides = [1, 1]} : vector<2x128xf32> to vector<2x32xf32>
      %73 = arith.negf %72 : vector<2x32xf32>
      %74 = math.exp %73 : vector<2x32xf32>
      %cst_54 = arith.constant 1.000000e+00 : f32
      %75 = vector.broadcast %cst_54 : f32 to vector<2x32xf32>
      %76 = arith.addf %75, %74 : vector<2x32xf32>
      %77 = arith.divf %75, %76 : vector<2x32xf32>
      %78 = vector.extract_strided_slice %71 {offsets = [0, 32], sizes = [2, 32], strides = [1, 1]} : vector<2x128xf32> to vector<2x32xf32>
      %79 = arith.negf %78 : vector<2x32xf32>
      %80 = math.exp %79 : vector<2x32xf32>
      %cst_55 = arith.constant 1.000000e+00 : f32
      %81 = vector.broadcast %cst_55 : f32 to vector<2x32xf32>
      %82 = arith.addf %81, %80 : vector<2x32xf32>
      %83 = arith.divf %81, %82 : vector<2x32xf32>
      %84 = vector.extract_strided_slice %71 {offsets = [0, 64], sizes = [2, 32], strides = [1, 1]} : vector<2x128xf32> to vector<2x32xf32>
      %85 = math.tanh %84 : vector<2x32xf32>
      %86 = vector.extract_strided_slice %71 {offsets = [0, 96], sizes = [2, 32], strides = [1, 1]} : vector<2x128xf32> to vector<2x32xf32>
      %87 = arith.negf %86 : vector<2x32xf32>
      %88 = math.exp %87 : vector<2x32xf32>
      %cst_56 = arith.constant 1.000000e+00 : f32
      %89 = vector.broadcast %cst_56 : f32 to vector<2x32xf32>
      %90 = arith.addf %89, %88 : vector<2x32xf32>
      %91 = arith.divf %89, %90 : vector<2x32xf32>
      %92 = arith.mulf %83, %58 : vector<2x32xf32>
      %93 = arith.mulf %77, %85 : vector<2x32xf32>
      %94 = arith.addf %92, %93 : vector<2x32xf32>
      %95 = math.tanh %94 : vector<2x32xf32>
      %96 = arith.mulf %91, %95 : vector<2x32xf32>
      %c0_57 = arith.constant 0 : index
      %c0_58 = arith.constant 0 : index
      %c0_59 = arith.constant 0 : index
      %97 = vector.load %arg6[%c0_57, %c0_58, %c0_59] : memref<2x8x32xf32, #tpu.memory_space<vmem>>, vector<2x8x32xf32>
      %c0_60 = arith.constant 0 : index
      %c0_61 = arith.constant 0 : index
      %98 = vector.load %arg7[%c0_60, %c0_61] : memref<2x8xf32, #tpu.memory_space<vmem>>, vector<2x8xf32>
      %99 = arith.truncf %97 : vector<2x8x32xf32> to vector<2x8x32xbf16>
      %100 = vector.shape_cast %99 : vector<2x8x32xbf16> to vector<16x32xbf16>
      %c0_62 = arith.constant 0 : index
      %c0_63 = arith.constant 0 : index
      %101 = vector.load %arg13[%c0_62, %c0_63] : memref<32x32xbf16, #tpu.memory_space<vmem>>, vector<32x32xbf16>
      %cst_64 = arith.constant dense<0.000000e+00> : vector<16x32xf32>
      %102 = tpu.matmul %100, %101, %cst_64 {dimension_numbers = #tpu.dot_dimension_numbers<[1], [0], [0], [1], [0, 0, 1, 1], [], []>} : vector<16x32xbf16>, vector<32x32xbf16>, vector<16x32xf32> -> vector<16x32xf32>
      %103 = vector.shape_cast %102 : vector<16x32xf32> to vector<2x8x32xf32>
      %104 = arith.truncf %96 : vector<2x32xf32> to vector<2x32xbf16>
      %c0_65 = arith.constant 0 : index
      %c0_66 = arith.constant 0 : index
      %105 = vector.load %arg14[%c0_65, %c0_66] : memref<32x32xbf16, #tpu.memory_space<vmem>>, vector<32x32xbf16>
      %cst_67 = arith.constant dense<0.000000e+00> : vector<2x32xf32>
      %106 = tpu.matmul %104, %105, %cst_67 {dimension_numbers = #tpu.dot_dimension_numbers<[1], [0], [0], [1], [0, 0, 1, 1], [], []>} : vector<2x32xbf16>, vector<32x32xbf16>, vector<2x32xf32> -> vector<2x32xf32>
      %107 = vector.shape_cast %106 : vector<2x32xf32> to vector<2x1x32xf32>
      %108 = vector.broadcast %107 : vector<2x1x32xf32> to vector<2x8x32xf32>
      %109 = arith.addf %103, %108 : vector<2x8x32xf32>
      %110 = vector.shape_cast %98 : vector<2x8xf32> to vector<2x8x1xf32>
      %c0_68 = arith.constant 0 : index
      %c0_69 = arith.constant 0 : index
      %111 = vector.load %arg15[%c0_68, %c0_69] : memref<1x32xf32, #tpu.memory_space<vmem>>, vector<1x32xf32>
      %112 = vector.shape_cast %111 : vector<1x32xf32> to vector<1x1x32xf32>
      %113 = vector.broadcast %110 : vector<2x8x1xf32> to vector<2x8x32xf32>
      %114 = vector.broadcast %112 : vector<1x1x32xf32> to vector<2x8x32xf32>
      %115 = arith.mulf %113, %114 : vector<2x8x32xf32>
      %116 = arith.addf %109, %115 : vector<2x8x32xf32>
      %c0_70 = arith.constant 0 : index
      %c0_71 = arith.constant 0 : index
      %117 = vector.load %arg17[%c0_70, %c0_71] : memref<1x32xf32, #tpu.memory_space<vmem>>, vector<1x32xf32>
      %118 = vector.shape_cast %117 : vector<1x32xf32> to vector<1x1x32xf32>
      %119 = vector.broadcast %118 : vector<1x1x32xf32> to vector<2x8x32xf32>
      %120 = arith.addf %116, %119 : vector<2x8x32xf32>
      %121 = math.tanh %120 : vector<2x8x32xf32>
      %c0_72 = arith.constant 0 : index
      %c0_73 = arith.constant 0 : index
      %122 = vector.load %arg16[%c0_72, %c0_73] : memref<1x32xf32, #tpu.memory_space<vmem>>, vector<1x32xf32>
      %123 = vector.shape_cast %122 : vector<1x32xf32> to vector<1x1x32xf32>
      %124 = vector.broadcast %123 : vector<1x1x32xf32> to vector<2x8x32xf32>
      %125 = arith.mulf %121, %124 : vector<2x8x32xf32>
      %cst_74 = arith.constant dense<0.000000e+00> : vector<2x8xf32>
      %126 = vector.multi_reduction <add>, %125, %cst_74 [2] : vector<2x8x32xf32> to vector<2x8xf32>
      %cst_75 = arith.constant dense<0xFF800000> : vector<2xf32>
      %127 = vector.multi_reduction <maximumf>, %126, %cst_75 [1] : vector<2x8xf32> to vector<2xf32>
      %128 = vector.shape_cast %127 : vector<2xf32> to vector<2x1xf32>
      %129 = vector.broadcast %128 : vector<2x1xf32> to vector<2x8xf32>
      %130 = arith.subf %126, %129 : vector<2x8xf32>
      %131 = math.exp %130 : vector<2x8xf32>
      %cst_76 = arith.constant dense<0.000000e+00> : vector<2xf32>
      %132 = vector.multi_reduction <add>, %131, %cst_76 [1] : vector<2x8xf32> to vector<2xf32>
      %133 = vector.shape_cast %132 : vector<2xf32> to vector<2x1xf32>
      %134 = vector.broadcast %133 : vector<2x1xf32> to vector<2x8xf32>
      %135 = arith.divf %131, %134 : vector<2x8xf32>
      %136 = vector.shape_cast %135 : vector<2x8xf32> to vector<2x8x1xf32>
      %137 = vector.broadcast %136 : vector<2x8x1xf32> to vector<2x8x32xf32>
      %138 = arith.mulf %137, %97 : vector<2x8x32xf32>
      %cst_77 = arith.constant dense<0.000000e+00> : vector<2x32xf32>
      %139 = vector.multi_reduction <add>, %138, %cst_77 [1] : vector<2x8x32xf32> to vector<2x32xf32>
      %140 = arith.addf %98, %135 : vector<2x8xf32>
      %c0_78 = arith.constant 0 : index
      %c0_79 = arith.constant 0 : index
      %141 = vector.load %arg20[%c0_78, %c0_79] : memref<16x1xf32, #tpu.memory_space<vmem>>, vector<16x1xf32>
      %cst_80 = arith.constant dense<0.000000e+00> : vector<2x1xf32>
      %142 = tpu.matmul %54, %141, %cst_80 {dimension_numbers = #tpu.dot_dimension_numbers<[1], [0], [0], [1], [0, 0, 1, 1], [], []>} : vector<2x16xf32>, vector<16x1xf32>, vector<2x1xf32> -> vector<2x1xf32>
      %c0_81 = arith.constant 0 : index
      %c0_82 = arith.constant 0 : index
      %143 = vector.load %arg21[%c0_81, %c0_82] : memref<32x1xf32, #tpu.memory_space<vmem>>, vector<32x1xf32>
      %cst_83 = arith.constant dense<0.000000e+00> : vector<2x1xf32>
      %144 = tpu.matmul %56, %143, %cst_83 {dimension_numbers = #tpu.dot_dimension_numbers<[1], [0], [0], [1], [0, 0, 1, 1], [], []>} : vector<2x32xf32>, vector<32x1xf32>, vector<2x1xf32> -> vector<2x1xf32>
      %145 = arith.addf %142, %144 : vector<2x1xf32>
      %c0_84 = arith.constant 0 : index
      %c0_85 = arith.constant 0 : index
      %146 = vector.load %arg22[%c0_84, %c0_85] : memref<1x1xf32, #tpu.memory_space<vmem>>, vector<1x1xf32>
      %147 = vector.broadcast %146 : vector<1x1xf32> to vector<2x1xf32>
      %148 = arith.addf %145, %147 : vector<2x1xf32>
      %149 = arith.negf %148 : vector<2x1xf32>
      %150 = math.exp %149 : vector<2x1xf32>
      %cst_86 = arith.constant 1.000000e+00 : f32
      %151 = vector.broadcast %cst_86 : f32 to vector<2x1xf32>
      %152 = arith.addf %151, %150 : vector<2x1xf32>
      %153 = arith.divf %151, %152 : vector<2x1xf32>
      %c0_87 = arith.constant 0 : index
      %c0_88 = arith.constant 0 : index
      %154 = vector.load %arg26[%c0_87, %c0_88] : memref<2x32xf32, #tpu.memory_space<vmem>>, vector<2x32xf32>
      tpu.vector_store %arg26[%c0_87, %c0_88], %139 {strides = array<i32>} : memref<2x32xf32, #tpu.memory_space<vmem>>, vector<2x32xf32>,
      %c0_89 = arith.constant 0 : index
      %c0_90 = arith.constant 0 : index
      %155 = vector.load %arg27[%c0_89, %c0_90] : memref<2x8xf32, #tpu.memory_space<vmem>>, vector<2x8xf32>
      tpu.vector_store %arg27[%c0_89, %c0_90], %135 {strides = array<i32>} : memref<2x8xf32, #tpu.memory_space<vmem>>, vector<2x8xf32>,
      %c0_91 = arith.constant 0 : index
      %c0_92 = arith.constant 0 : index
      %156 = vector.load %arg28[%c0_91, %c0_92] : memref<2x1xf32, #tpu.memory_space<vmem>>, vector<2x1xf32>
      tpu.vector_store %arg28[%c0_91, %c0_92], %153 {strides = array<i32>} : memref<2x1xf32, #tpu.memory_space<vmem>>, vector<2x1xf32>,
      %cst_93 = arith.constant 0.000000e+00 : f32
      %157 = vector.broadcast %cst_93 : f32 to vector<2x640xf32>
      %c0_94 = arith.constant 0 : index
      %c0_95 = arith.constant 0 : index
      %158 = vector.load %arg24[%c0_94, %c0_95] : memref<2x640xf32, #tpu.memory_space<vmem>>, vector<2x640xf32>
      tpu.vector_store %arg24[%c0_94, %c0_95], %157 {strides = array<i32>} : memref<2x640xf32, #tpu.memory_space<vmem>>, vector<2x640xf32>,
      %c0_96 = arith.constant 0 : index
      %c0_97 = arith.constant 0 : index
      %159 = vector.load %arg24[%c0_96, %c0_97] : memref<2x640xf32, #tpu.memory_space<vmem>>, vector<2x32xf32>
      tpu.vector_store %arg24[%c0_96, %c0_97], %96 {strides = array<i32>} : memref<2x640xf32, #tpu.memory_space<vmem>>, vector<2x32xf32>,
      %c0_98 = arith.constant 0 : index
      %c128 = arith.constant 128 : index
      %160 = vector.load %arg24[%c0_98, %c128] : memref<2x640xf32, #tpu.memory_space<vmem>>, vector<2x32xf32>
      tpu.vector_store %arg24[%c0_98, %c128], %94 {strides = array<i32>} : memref<2x640xf32, #tpu.memory_space<vmem>>, vector<2x32xf32>,
      %c0_99 = arith.constant 0 : index
      %c256 = arith.constant 256 : index
      %161 = vector.load %arg24[%c0_99, %c256] : memref<2x640xf32, #tpu.memory_space<vmem>>, vector<2x32xf32>
      tpu.vector_store %arg24[%c0_99, %c256], %139 {strides = array<i32>} : memref<2x640xf32, #tpu.memory_space<vmem>>, vector<2x32xf32>,
      %c0_100 = arith.constant 0 : index
      %c384 = arith.constant 384 : index
      %162 = vector.load %arg24[%c0_100, %c384] : memref<2x640xf32, #tpu.memory_space<vmem>>, vector<2x8xf32>
      tpu.vector_store %arg24[%c0_100, %c384], %135 {strides = array<i32>} : memref<2x640xf32, #tpu.memory_space<vmem>>, vector<2x8xf32>,
      %c0_101 = arith.constant 0 : index
      %c512 = arith.constant 512 : index
      %163 = vector.load %arg24[%c0_101, %c512] : memref<2x640xf32, #tpu.memory_space<vmem>>, vector<2x8xf32>
      tpu.vector_store %arg24[%c0_101, %c512], %140 {strides = array<i32>} : memref<2x640xf32, #tpu.memory_space<vmem>>, vector<2x8xf32>,
    } else {
    }
    %c0 = arith.constant 0 : index
    %c0_1 = arith.constant 0 : index
    %3 = vector.load %arg26[%c0, %c0_1] : memref<2x32xf32, #tpu.memory_space<vmem>>, vector<2x32xf32>
    %4 = arith.truncf %3 : vector<2x32xf32> to vector<2x32xbf16>
    %c0_2 = arith.constant 0 : index
    %c0_3 = arith.constant 0 : index
    %5 = vector.load %arg18[%c0_2, %c0_3] : memref<32x128xbf16, #tpu.memory_space<vmem>>, vector<32x128xbf16>
    %cst = arith.constant dense<0.000000e+00> : vector<2x128xf32>
    %6 = tpu.matmul %4, %5, %cst {dimension_numbers = #tpu.dot_dimension_numbers<[1], [0], [0], [1], [0, 0, 1, 1], [], []>} : vector<2x32xbf16>, vector<32x128xbf16>, vector<2x128xf32> -> vector<2x128xf32>
    %c0_4 = arith.constant 0 : index
    %c0_5 = arith.constant 0 : index
    %7 = vector.load %arg19[%c0_4, %c0_5] : memref<1x128xf32, #tpu.memory_space<vmem>>, vector<1x128xf32>
    %8 = vector.broadcast %7 : vector<1x128xf32> to vector<2x128xf32>
    %9 = arith.addf %6, %8 : vector<2x128xf32>
    %c128_i32 = arith.constant 128 : i32
    %10 = arith.muli %arg0, %c128_i32 : i32
    %c0_6 = arith.constant 0 : index
    %c0_7 = arith.constant 0 : index
    %11 = vector.load %arg2[%c0_6, %c0_7] : memref<2x8xi32, #tpu.memory_space<vmem>>, vector<2x8xi32>
    %12 = tpu.iota {dimensions = array<i32: 2>} : vector<2x8x128xi32>
    %13 = vector.broadcast %10 : i32 to vector<2x8x128xi32>
    %14 = arith.addi %12, %13 : vector<2x8x128xi32>
    %15 = vector.shape_cast %11 : vector<2x8xi32> to vector<2x8x1xi32>
    %16 = vector.broadcast %15 : vector<2x8x1xi32> to vector<2x8x128xi32>
    %17 = arith.cmpi eq, %16, %14 : vector<2x8x128xi32>
    %c0_8 = arith.constant 0 : index
    %c0_9 = arith.constant 0 : index
    %18 = vector.load %arg27[%c0_8, %c0_9] : memref<2x8xf32, #tpu.memory_space<vmem>>, vector<2x8xf32>
    %19 = vector.shape_cast %18 : vector<2x8xf32> to vector<2x8x1xf32>
    %cst_10 = arith.constant 0.000000e+00 : f32
    %20 = vector.shape_cast %19 : vector<2x8x1xf32> to vector<2x8x1xf32>
    %21 = vector.broadcast %20 : vector<2x8x1xf32> to vector<2x8x128xf32>
    %22 = vector.broadcast %cst_10 : f32 to vector<2x8x128xf32>
    %23 = arith.select %17, %21, %22 : vector<2x8x128xi1>, vector<2x8x128xf32>
    %cst_11 = arith.constant dense<0.000000e+00> : vector<2x128xf32>
    %24 = vector.multi_reduction <add>, %23, %cst_11 [1] : vector<2x8x128xf32> to vector<2x128xf32>
    %c0_12 = arith.constant 0 : index
    %c0_13 = arith.constant 0 : index
    %25 = vector.load %arg28[%c0_12, %c0_13] : memref<2x1xf32, #tpu.memory_space<vmem>>, vector<2x1xf32>
    %cst_14 = arith.constant 1.000000e+00 : f32
    %26 = vector.broadcast %cst_14 : f32 to vector<2x1xf32>
    %27 = arith.subf %26, %25 : vector<2x1xf32>
    %28 = vector.broadcast %27 : vector<2x1xf32> to vector<2x128xf32>
    %29 = arith.mulf %28, %9 : vector<2x128xf32>
    %30 = vector.broadcast %25 : vector<2x1xf32> to vector<2x128xf32>
    %31 = arith.mulf %30, %24 : vector<2x128xf32>
    %32 = arith.addf %29, %31 : vector<2x128xf32>
    %c0_15 = arith.constant 0 : index
    %c0_16 = arith.constant 0 : index
    %33 = vector.load %arg23[%c0_15, %c0_16] : memref<2x128xf32, #tpu.memory_space<vmem>>, vector<2x128xf32>
    tpu.vector_store %arg23[%c0_15, %c0_16], %32 {strides = array<i32>} : memref<2x128xf32, #tpu.memory_space<vmem>>, vector<2x128xf32>,
    return
  }
  func.func @transform_0(%arg0: i32, %arg1: memref<2xi32, #tpu.memory_space<smem>>) -> (i32, i32) {
    %c0_i32 = arith.constant 0 : i32
    %c0_i32_0 = arith.constant 0 : i32
    %c0_i32_1 = arith.constant 0 : i32
    return %c0_i32, %c0_i32_0 : i32, i32
  }
  func.func @transform_1(%arg0: i32, %arg1: memref<2xi32, #tpu.memory_space<smem>>) -> (i32, i32) {
    %c0_i32 = arith.constant 0 : i32
    %c0_i32_0 = arith.constant 0 : i32
    %c0_i32_1 = arith.constant 0 : i32
    return %c0_i32, %c0_i32_0 : i32, i32
  }
  func.func @transform_2(%arg0: i32, %arg1: memref<2xi32, #tpu.memory_space<smem>>) -> (i32, i32) {
    %c0_i32 = arith.constant 0 : i32
    %c0_i32_0 = arith.constant 0 : i32
    %c0_i32_1 = arith.constant 0 : i32
    return %c0_i32, %c0_i32_0 : i32, i32
  }
  func.func @transform_3(%arg0: i32, %arg1: memref<2xi32, #tpu.memory_space<smem>>) -> (i32, i32) {
    %c0_i32 = arith.constant 0 : i32
    %c0_i32_0 = arith.constant 0 : i32
    %c0_i32_1 = arith.constant 0 : i32
    return %c0_i32, %c0_i32_0 : i32, i32
  }
  func.func @transform_4(%arg0: i32, %arg1: memref<2xi32, #tpu.memory_space<smem>>) -> (i32, i32, i32) {
    %c0_i32 = arith.constant 0 : i32
    %c0_i32_0 = arith.constant 0 : i32
    %c0_i32_1 = arith.constant 0 : i32
    %c0_i32_2 = arith.constant 0 : i32
    return %c0_i32, %c0_i32_0, %c0_i32_1 : i32, i32, i32
  }
  func.func @transform_5(%arg0: i32, %arg1: memref<2xi32, #tpu.memory_space<smem>>) -> (i32, i32) {
    %c0_i32 = arith.constant 0 : i32
    %c0_i32_0 = arith.constant 0 : i32
    %c0_i32_1 = arith.constant 0 : i32
    return %c0_i32, %c0_i32_0 : i32, i32
  }
  func.func @transform_7(%arg0: i32, %arg1: memref<2xi32, #tpu.memory_space<smem>>) -> (i32, i32) {
    %c0_i32 = arith.constant 0 : i32
    %c0_i32_0 = arith.constant 0 : i32
    %c0_i32_1 = arith.constant 0 : i32
    return %c0_i32, %c0_i32_0 : i32, i32
  }
  func.func @transform_8(%arg0: i32, %arg1: memref<2xi32, #tpu.memory_space<smem>>) -> (i32, i32) {
    %c0_i32 = arith.constant 0 : i32
    %c0_i32_0 = arith.constant 0 : i32
    %c0_i32_1 = arith.constant 0 : i32
    return %c0_i32, %c0_i32_0 : i32, i32
  }
  func.func @transform_9(%arg0: i32, %arg1: memref<2xi32, #tpu.memory_space<smem>>) -> (i32, i32) {
    %c0_i32 = arith.constant 0 : i32
    %c0_i32_0 = arith.constant 0 : i32
    %c0_i32_1 = arith.constant 0 : i32
    return %c0_i32, %c0_i32_0 : i32, i32
  }
  func.func @transform_10(%arg0: i32, %arg1: memref<2xi32, #tpu.memory_space<smem>>) -> (i32, i32) {
    %c0_i32 = arith.constant 0 : i32
    %c0_i32_0 = arith.constant 0 : i32
    %c0_i32_1 = arith.constant 0 : i32
    return %c0_i32, %c0_i32_0 : i32, i32
  }
  func.func @transform_11(%arg0: i32, %arg1: memref<2xi32, #tpu.memory_space<smem>>) -> (i32, i32) {
    %c0_i32 = arith.constant 0 : i32
    %c0_i32_0 = arith.constant 0 : i32
    %c0_i32_1 = arith.constant 0 : i32
    return %c0_i32, %c0_i32_0 : i32, i32
  }
  func.func @transform_12(%arg0: i32, %arg1: memref<2xi32, #tpu.memory_space<smem>>) -> (i32, i32) {
    %c0_i32 = arith.constant 0 : i32
    %c0_i32_0 = arith.constant 0 : i32
    %c0_i32_1 = arith.constant 0 : i32
    return %c0_i32, %c0_i32_0 : i32, i32
  }
  func.func @transform_13(%arg0: i32, %arg1: memref<2xi32, #tpu.memory_space<smem>>) -> (i32, i32) {
    %c0_i32 = arith.constant 0 : i32
    %c0_i32_0 = arith.constant 0 : i32
    %c0_i32_1 = arith.constant 0 : i32
    return %c0_i32, %c0_i32_0 : i32, i32
  }
  func.func @transform_14(%arg0: i32, %arg1: memref<2xi32, #tpu.memory_space<smem>>) -> (i32, i32) {
    %c0_i32 = arith.constant 0 : i32
    %c0_i32_0 = arith.constant 0 : i32
    %c0_i32_1 = arith.constant 0 : i32
    return %c0_i32, %c0_i32_0 : i32, i32
  }
  func.func @transform_15(%arg0: i32, %arg1: memref<2xi32, #tpu.memory_space<smem>>) -> (i32, i32) {
    %c0_i32 = arith.constant 0 : i32
    %c0_i32_0 = arith.constant 0 : i32
    %c0_i32_1 = arith.constant 0 : i32
    return %c0_i32, %c0_i32_0 : i32, i32
  }
  func.func @transform_16(%arg0: i32, %arg1: memref<2xi32, #tpu.memory_space<smem>>) -> (i32, i32) {
    %c0_i32 = arith.constant 0 : i32
    %c0_i32_0 = arith.constant 0 : i32
    return %c0_i32, %arg0 : i32, i32
  }
  func.func @transform_17(%arg0: i32, %arg1: memref<2xi32, #tpu.memory_space<smem>>) -> (i32, i32) {
    %c0_i32 = arith.constant 0 : i32
    %c0_i32_0 = arith.constant 0 : i32
    return %c0_i32, %arg0 : i32, i32
  }
  func.func @transform_18(%arg0: i32, %arg1: memref<2xi32, #tpu.memory_space<smem>>) -> (i32, i32) {
    %c0_i32 = arith.constant 0 : i32
    %c0_i32_0 = arith.constant 0 : i32
    %c0_i32_1 = arith.constant 0 : i32
    return %c0_i32, %c0_i32_0 : i32, i32
  }
  func.func @transform_19(%arg0: i32, %arg1: memref<2xi32, #tpu.memory_space<smem>>) -> (i32, i32) {
    %c0_i32 = arith.constant 0 : i32
    %c0_i32_0 = arith.constant 0 : i32
    %c0_i32_1 = arith.constant 0 : i32
    return %c0_i32, %c0_i32_0 : i32, i32
  }
  func.func @transform_20(%arg0: i32, %arg1: memref<2xi32, #tpu.memory_space<smem>>) -> (i32, i32) {
    %c0_i32 = arith.constant 0 : i32
    %c0_i32_0 = arith.constant 0 : i32
    %c0_i32_1 = arith.constant 0 : i32
    return %c0_i32, %c0_i32_0 : i32, i32
  }
  func.func @transform_21(%arg0: i32, %arg1: memref<2xi32, #tpu.memory_space<smem>>) -> (i32, i32) {
    %c0_i32 = arith.constant 0 : i32
    %c0_i32_0 = arith.constant 0 : i32
    return %c0_i32, %arg0 : i32, i32
  }
  func.func @transform_22(%arg0: i32, %arg1: memref<2xi32, #tpu.memory_space<smem>>) -> (i32, i32) {
    %c0_i32 = arith.constant 0 : i32
    %c0_i32_0 = arith.constant 0 : i32
    %c0_i32_1 = arith.constant 0 : i32
    return %c0_i32, %c0_i32_0 : i32, i32
  }
}

</mosaic_0001>

<llo_original>
// kernel: attention_decoder_forward.1
$region0: #{attention_decoder_forward.1}
  #allocation0 [shape = 'u32[]', space=smem, size = 0x4, offset = 0x4, fixed_abs, tag = 'smem constant byte address 0x4 - core index']
  #allocation1 [shape = 'u32[144,128]{1,0:T(1,128)}', space=vmem, size = 0x12000, scoped, tag = 'internal scratch']
  #allocation2 [shape = 'f32[2,16]{1,0:T(2,128)}', space=vmem, size = 0x400, scoped, tag = 'scratch operand']
  #allocation3 [shape = 'f32[2,32]{1,0:T(2,128)}', space=vmem, size = 0x400, scoped, tag = 'scratch operand']
  #allocation4 [shape = 'f32[2,8]{1,0:T(2,128)}', space=vmem, size = 0x400, scoped, tag = 'scratch operand']
  #allocation5 [shape = 'f32[2,1]{1,0:T(2,128)}', space=vmem, size = 0x400, scoped, tag = 'scratch operand']
  #allocation6 [shape = 's32[2]{0}', space=sflag, size = 0x8, scoped, tag = 'scratch operand']
  #allocation7 [shape = 's32[1]{0}', space=sflag, size = 0x4, scoped, tag = 'scoped memory for attention_decoder_forward.1']
  #allocation8 [shape = 'u8[512]{0}', space=smem, size = 0x200, scoped, tag = 'prefetched SMEM operand 0']
  #allocation9 [shape = 'f32[1,1]{1,0:T(1,128)S(1)}', space=vmem, size = 0x200, scoped, tag = 'scoped memory for attention_decoder_forward.1']
  #allocation13 [shape = 's32[]', space=sflag, size = 0x4, offset = 0, fixed_abs, tag = 'sflag constant byte address 0x0 - dummy sync flag']
  #allocation14 [shape = 's32[]', space=sflag, size = 0x4, offset = 0, fixed_abs, tag = 'sflag constant byte address 0x0 - dummy sync flag']
  %s0 = inlined_call_operand.vmem [shape: s32[2], index: 0, kind: input, shape index: {}]
  %s1 = inlined_call_operand.vmem [shape: s32[2,8], index: 1, kind: input, shape index: {}]
  %s2 = inlined_call_operand.vmem [shape: f32[2,32], index: 2, kind: input, shape index: {}]
  %s3 = inlined_call_operand.vmem [shape: f32[2,32], index: 3, kind: input, shape index: {}]
  %s4 = inlined_call_operand.vmem [shape: f32[2,32], index: 4, kind: input, shape index: {}]
  %s5 = inlined_call_operand.vmem [shape: f32[2,8,32], index: 5, kind: input, shape index: {}]
  %s6 = inlined_call_operand.vmem [shape: f32[2,8], index: 6, kind: input, shape index: {}]
  %s7 = inlined_call_operand.vmem [shape: f32[300,16], index: 7, kind: input, shape index: {}]
  %s8 = inlined_call_operand.vmem [shape: bf16[16,128], index: 8, kind: input, shape index: {}]
  %s9 = inlined_call_operand.vmem [shape: bf16[32,128], index: 9, kind: input, shape index: {}]
  %s10 = inlined_call_operand.vmem [shape: bf16[32,128], index: 10, kind: input, shape index: {}]
  %s11 = inlined_call_operand.vmem [shape: f32[1,128], index: 11, kind: input, shape index: {}]
  %s12 = inlined_call_operand.vmem [shape: bf16[32,32], index: 12, kind: input, shape index: {}]
  %s13 = inlined_call_operand.vmem [shape: bf16[32,32], index: 13, kind: input, shape index: {}]
  %s14 = inlined_call_operand.vmem [shape: f32[1,32], index: 14, kind: input, shape index: {}]
  %s15 = inlined_call_operand.vmem [shape: f32[1,32], index: 15, kind: input, shape index: {}]
  %s16 = inlined_call_operand.vmem [shape: f32[1,32], index: 16, kind: input, shape index: {}]
  %s17 = inlined_call_operand.vmem [shape: bf16[32,384], index: 17, kind: input, shape index: {}]
  %s18 = inlined_call_operand.vmem [shape: f32[1,384], index: 18, kind: input, shape index: {}]
  %s19 = inlined_call_operand.vmem [shape: f32[16,1], index: 19, kind: input, shape index: {}]
  %s20 = inlined_call_operand.vmem [shape: f32[32,1], index: 20, kind: input, shape index: {}]
  %s21 = inlined_call_operand.<no memory space> [shape: f32[1,1], index: 21, kind: input, shape index: {}]
  %s22 = inlined_call_operand.hbm [shape: f32[2,384], index: 22, kind: output, shape index: {0}]
  %s23 = inlined_call_operand.vmem [shape: f32[2,640], index: 23, kind: output, shape index: {1}]
  %24 = xla_tuple %s22, %s23
  %s25 = sld [smem:[#allocation0]]
  $region226: #{attention_decoder_forward.1} parent=0
    _
  %s27 = ssub.s32 1, %s25
  %s28 = scalar_select 0, %s27, %s25
  %s29 = sshll.u32 %s0, 4
  %s30 = int_to_ptr.vmem [resolvable:$true] %s29
  %32 = dma.vmem_to_smem %s30, 16, [#allocation8], [#allocation7]
  %v33 = vstv %s21
  %34 = vst [vmem:[#allocation9] sm:$0x1] %v33
  %35 = dma.done [#allocation7], 16
  %36 = sfence
  $region1: #{attention_decoder_forward.1} parent=0
    #allocation10 [shape = 'u8[16384]{0}', space=vmem, size = 0x4000, scoped, tag = 'input window, operand 17']
    #allocation11 [shape = 'u8[2048]{0}', space=vmem, size = 0x800, scoped, tag = 'output window, operand 0']
    #allocation12 [shape = 's32[2]{0}', space=sflag, size = 0x8, scoped, tag = 'scoped memory for attention_decoder_forward.1']
    %37 = vsyncpa [#allocation12], 0
    %s38 = scalar_lea.sflag [#allocation12], 1
    %39 = vsyncpa %s38, 0
    loop: start=0, step=1, limit=5
    $region2: #{attention_decoder_forward.1} parent=1 // loop_pre_header
      _
    $region3: #{attention_decoder_forward.1} parent=1 // loop_header
      %s41 = sphi 0, %s45
      %p42 = scmp.ge.s32.totalorder %s41, 5
      %s49 = sphi 0, %s49
      %s51 = sphi 0, %s49
      %s52 = sphi 0, %s51
      %s66 = sphi 0, %s52
      %s70 = sphi 0, %s70
      %s72 = sphi 0, %s70
      %s73 = sphi 0, %s72
      %s87 = sphi 0, %s73
      %s91 = sphi 0, %s91
      %s93 = sphi 0, %s91
      %s94 = sphi 0, %s93
      %s108 = sphi 0, %s94
      %s112 = sphi 0, %s112
      %s114 = sphi 0, %s112
      %s115 = sphi 0, %s114
      %s129 = sphi 0, %s115
      %s133 = sphi 0, %s133
      %s135 = sphi 0, %s133
      %s136 = sphi 0, %s135
      %s150 = sphi 0, %s136
      %s154 = sphi 0, %s154
      %s156 = sphi 0, %s154
      %s157 = sphi 0, %s156
      %s171 = sphi 0, %s157
      %s175 = sphi 0, %s175
      %s177 = sphi 0, %s175
      %s178 = sphi 0, %s177
      %s192 = sphi 0, %s178
      %s196 = sphi 0, %s196
      %s198 = sphi 0, %s196
      %s199 = sphi 0, %s198
      %s213 = sphi 0, %s199
      %s217 = sphi 0, %s217
      %s219 = sphi 0, %s217
      %s220 = sphi 0, %s219
      %s234 = sphi 0, %s220
      %s238 = sphi 0, %s238
      %s240 = sphi 0, %s238
      %s241 = sphi 0, %s240
      %s255 = sphi 0, %s241
      %s259 = sphi 0, %s259
      %s261 = sphi 0, %s259
      %s262 = sphi 0, %s261
      %s276 = sphi 0, %s262
      %s280 = sphi 0, %s280
      %s282 = sphi 0, %s280
      %s283 = sphi 0, %s282
      %s297 = sphi 0, %s283
      %s301 = sphi 0, %s301
      %s303 = sphi 0, %s301
      %s304 = sphi 0, %s303
      %s318 = sphi 0, %s304
      %s322 = sphi 0, %s322
      %s324 = sphi 0, %s322
      %s325 = sphi 0, %s324
      %s339 = sphi 0, %s325
      %s343 = sphi 0, %s343
      %s345 = sphi 0, %s343
      %s346 = sphi 0, %s345
      %s360 = sphi 0, %s346
      %s366 = sphi 0, %s368
      %s369 = sphi 0, %s366
      %s370 = sphi 0, %s369
      %s386 = sphi 0, %s370
      %s392 = sphi 0, %s394
      %s395 = sphi 0, %s392
      %s396 = sphi 0, %s395
      %s412 = sphi 0, %s396
      %s416 = sphi 0, %s416
      %s418 = sphi 0, %s416
      %s419 = sphi 0, %s418
      %s433 = sphi 0, %s419
      %s437 = sphi 0, %s437
      %s439 = sphi 0, %s437
      %s440 = sphi 0, %s439
      %s454 = sphi 0, %s440
      %s458 = sphi 0, %s458
      %s460 = sphi 0, %s458
      %s461 = sphi 0, %s460
      %s475 = sphi 0, %s461
      %s481 = sphi 0, %s483
      %s484 = sphi 0, %s481
      %s485 = sphi 0, %s484
      %s501 = sphi 0, %s485
      %s505 = sphi 0, %s505
      %s507 = sphi 0, %s505
      %s508 = sphi 0, %s507
      %s522 = sphi 0, %s508
    $region4: #{attention_decoder_forward.1} parent=1 // loop_header_branch
      %44 = sbr.rel (%p42) target = $region8
    $region5: #{attention_decoder_forward.1} parent=1 // loop_body
      %s46 = ssub.s32 %s41, 1
      %s47 = ssub.s32 %s41, 2
      %s48 = sadd.s32 %s41, 1
      %s50 = sadd.s32 %s49, 1
      %p53 = scmp.eq.s32.totalorder %s41, 2
      %p54 = scmp.ne.s32.totalorder %s49, %s51
      %p55 = scmp.eq.s32.totalorder %s41, 0
      %p56 = por %p54, %p55
      %p57 = scmp.ne.s32.totalorder %s49, %s51
      %p58 = scmp.eq.s32.totalorder %s46, 2
      %p59 = por %p57, %p58
      %p60 = scmp.ne.s32.totalorder %s51, %s52
      %p61 = scmp.eq.s32.totalorder %s46, 0
      %p62 = por %p60, %p61
      %p63 = scmp.ne.s32.totalorder %s51, %s52
      %p64 = scmp.eq.s32.totalorder %s47, 2
      %p65 = por %p63, %p64
      %p67 = scmp.ne.s32.totalorder %s52, %s66
      %p68 = scmp.eq.s32.totalorder %s47, 0
      %p69 = por %p67, %p68
      %s71 = sadd.s32 %s70, 1
      %p74 = scmp.eq.s32.totalorder %s41, 2
      %p75 = scmp.ne.s32.totalorder %s70, %s72
      %p76 = scmp.eq.s32.totalorder %s41, 0
      %p77 = por %p75, %p76
      %p78 = scmp.ne.s32.totalorder %s70, %s72
      %p79 = scmp.eq.s32.totalorder %s46, 2
      %p80 = por %p78, %p79
      %p81 = scmp.ne.s32.totalorder %s72, %s73
      %p82 = scmp.eq.s32.totalorder %s46, 0
      %p83 = por %p81, %p82
      %p84 = scmp.ne.s32.totalorder %s72, %s73
      %p85 = scmp.eq.s32.totalorder %s47, 2
      %p86 = por %p84, %p85
      %p88 = scmp.ne.s32.totalorder %s73, %s87
      %p89 = scmp.eq.s32.totalorder %s47, 0
      %p90 = por %p88, %p89
      %s92 = sadd.s32 %s91, 1
      %p95 = scmp.eq.s32.totalorder %s41, 2
      %p96 = scmp.ne.s32.totalorder %s91, %s93
      %p97 = scmp.eq.s32.totalorder %s41, 0
      %p98 = por %p96, %p97
      %p99 = scmp.ne.s32.totalorder %s91, %s93
      %p100 = scmp.eq.s32.totalorder %s46, 2
      %p101 = por %p99, %p100
      %p102 = scmp.ne.s32.totalorder %s93, %s94
      %p103 = scmp.eq.s32.totalorder %s46, 0
      %p104 = por %p102, %p103
      %p105 = scmp.ne.s32.totalorder %s93, %s94
      %p106 = scmp.eq.s32.totalorder %s47, 2
      %p107 = por %p105, %p106
      %p109 = scmp.ne.s32.totalorder %s94, %s108
      %p110 = scmp.eq.s32.totalorder %s47, 0
      %p111 = por %p109, %p110
      %s113 = sadd.s32 %s112, 1
      %p116 = scmp.eq.s32.totalorder %s41, 2
      %p117 = scmp.ne.s32.totalorder %s112, %s114
      %p118 = scmp.eq.s32.totalorder %s41, 0
      %p119 = por %p117, %p118
      %p120 = scmp.ne.s32.totalorder %s112, %s114
      %p121 = scmp.eq.s32.totalorder %s46, 2
      %p122 = por %p120, %p121
      %p123 = scmp.ne.s32.totalorder %s114, %s115
      %p124 = scmp.eq.s32.totalorder %s46, 0
      %p125 = por %p123, %p124
      %p126 = scmp.ne.s32.totalorder %s114, %s115
      %p127 = scmp.eq.s32.totalorder %s47, 2
      %p128 = por %p126, %p127
      %p130 = scmp.ne.s32.totalorder %s115, %s129
      %p131 = scmp.eq.s32.totalorder %s47, 0
      %p132 = por %p130, %p131
      %s134 = sadd.s32 %s133, 1
      %p137 = scmp.eq.s32.totalorder %s41, 2
      %p138 = scmp.ne.s32.totalorder %s133, %s135
      %p139 = scmp.eq.s32.totalorder %s41, 0
      %p140 = por %p138, %p139
      %p141 = scmp.ne.s32.totalorder %s133, %s135
      %p142 = scmp.eq.s32.totalorder %s46, 2
      %p143 = por %p141, %p142
      %p144 = scmp.ne.s32.totalorder %s135, %s136
      %p145 = scmp.eq.s32.totalorder %s46, 0
      %p146 = por %p144, %p145
      %p147 = scmp.ne.s32.totalorder %s135, %s136
      %p148 = scmp.eq.s32.totalorder %s47, 2
      %p149 = por %p147, %p148
      %p151 = scmp.ne.s32.totalorder %s136, %s150
      %p152 = scmp.eq.s32.totalorder %s47, 0
      %p153 = por %p151, %p152
      %s155 = sadd.s32 %s154, 1
      %p158 = scmp.eq.s32.totalorder %s41, 2
      %p159 = scmp.ne.s32.totalorder %s154, %s156
      %p160 = scmp.eq.s32.totalorder %s41, 0
      %p161 = por %p159, %p160
      %p162 = scmp.ne.s32.totalorder %s154, %s156
      %p163 = scmp.eq.s32.totalorder %s46, 2
      %p164 = por %p162, %p163
      %p165 = scmp.ne.s32.totalorder %s156, %s157
      %p166 = scmp.eq.s32.totalorder %s46, 0
      %p167 = por %p165, %p166
      %p168 = scmp.ne.s32.totalorder %s156, %s157
      %p169 = scmp.eq.s32.totalorder %s47, 2
      %p170 = por %p168, %p169
      %p172 = scmp.ne.s32.totalorder %s157, %s171
      %p173 = scmp.eq.s32.totalorder %s47, 0
      %p174 = por %p172, %p173
      %s176 = sadd.s32 %s175, 1
      %p179 = scmp.eq.s32.totalorder %s41, 2
      %p180 = scmp.ne.s32.totalorder %s175, %s177
      %p181 = scmp.eq.s32.totalorder %s41, 0
      %p182 = por %p180, %p181
      %p183 = scmp.ne.s32.totalorder %s175, %s177
      %p184 = scmp.eq.s32.totalorder %s46, 2
      %p185 = por %p183, %p184
      %p186 = scmp.ne.s32.totalorder %s177, %s178
      %p187 = scmp.eq.s32.totalorder %s46, 0
      %p188 = por %p186, %p187
      %p189 = scmp.ne.s32.totalorder %s177, %s178
      %p190 = scmp.eq.s32.totalorder %s47, 2
      %p191 = por %p189, %p190
      %p193 = scmp.ne.s32.totalorder %s178, %s192
      %p194 = scmp.eq.s32.totalorder %s47, 0
      %p195 = por %p193, %p194
      %s197 = sadd.s32 %s196, 1
      %p200 = scmp.eq.s32.totalorder %s41, 2
      %p201 = scmp.ne.s32.totalorder %s196, %s198
      %p202 = scmp.eq.s32.totalorder %s41, 0
      %p203 = por %p201, %p202
      %p204 = scmp.ne.s32.totalorder %s196, %s198
      %p205 = scmp.eq.s32.totalorder %s46, 2
      %p206 = por %p204, %p205
      %p207 = scmp.ne.s32.totalorder %s198, %s199
      %p208 = scmp.eq.s32.totalorder %s46, 0
      %p209 = por %p207, %p208
      %p210 = scmp.ne.s32.totalorder %s198, %s199
      %p211 = scmp.eq.s32.totalorder %s47, 2
      %p212 = por %p210, %p211
      %p214 = scmp.ne.s32.totalorder %s199, %s213
      %p215 = scmp.eq.s32.totalorder %s47, 0
      %p216 = por %p214, %p215
      %s218 = sadd.s32 %s217, 1
      %p221 = scmp.eq.s32.totalorder %s41, 2
      %p222 = scmp.ne.s32.totalorder %s217, %s219
      %p223 = scmp.eq.s32.totalorder %s41, 0
      %p224 = por %p222, %p223
      %p225 = scmp.ne.s32.totalorder %s217, %s219
      %p226 = scmp.eq.s32.totalorder %s46, 2
      %p227 = por %p225, %p226
      %p228 = scmp.ne.s32.totalorder %s219, %s220
      %p229 = scmp.eq.s32.totalorder %s46, 0
      %p230 = por %p228, %p229
      %p231 = scmp.ne.s32.totalorder %s219, %s220
      %p232 = scmp.eq.s32.totalorder %s47, 2
      %p233 = por %p231, %p232
      %p235 = scmp.ne.s32.totalorder %s220, %s234
      %p236 = scmp.eq.s32.totalorder %s47, 0
      %p237 = por %p235, %p236
      %s239 = sadd.s32 %s238, 1
      %p242 = scmp.eq.s32.totalorder %s41, 2
      %p243 = scmp.ne.s32.totalorder %s238, %s240
      %p244 = scmp.eq.s32.totalorder %s41, 0
      %p245 = por %p243, %p244
      %p246 = scmp.ne.s32.totalorder %s238, %s240
      %p247 = scmp.eq.s32.totalorder %s46, 2
      %p248 = por %p246, %p247
      %p249 = scmp.ne.s32.totalorder %s240, %s241
      %p250 = scmp.eq.s32.totalorder %s46, 0
      %p251 = por %p249, %p250
      %p252 = scmp.ne.s32.totalorder %s240, %s241
      %p253 = scmp.eq.s32.totalorder %s47, 2
      %p254 = por %p252, %p253
      %p256 = scmp.ne.s32.totalorder %s241, %s255
      %p257 = scmp.eq.s32.totalorder %s47, 0
      %p258 = por %p256, %p257
      %s260 = sadd.s32 %s259, 1
      %p263 = scmp.eq.s32.totalorder %s41, 2
      %p264 = scmp.ne.s32.totalorder %s259, %s261
      %p265 = scmp.eq.s32.totalorder %s41, 0
      %p266 = por %p264, %p265
      %p267 = scmp.ne.s32.totalorder %s259, %s261
      %p268 = scmp.eq.s32.totalorder %s46, 2
      %p269 = por %p267, %p268
      %p270 = scmp.ne.s32.totalorder %s261, %s262
      %p271 = scmp.eq.s32.totalorder %s46, 0
      %p272 = por %p270, %p271
      %p273 = scmp.ne.s32.totalorder %s261, %s262
      %p274 = scmp.eq.s32.totalorder %s47, 2
      %p275 = por %p273, %p274
      %p277 = scmp.ne.s32.totalorder %s262, %s276
      %p278 = scmp.eq.s32.totalorder %s47, 0
      %p279 = por %p277, %p278
      %s281 = sadd.s32 %s280, 1
      %p284 = scmp.eq.s32.totalorder %s41, 2
      %p285 = scmp.ne.s32.totalorder %s280, %s282
      %p286 = scmp.eq.s32.totalorder %s41, 0
      %p287 = por %p285, %p286
      %p288 = scmp.ne.s32.totalorder %s280, %s282
      %p289 = scmp.eq.s32.totalorder %s46, 2
      %p290 = por %p288, %p289
      %p291 = scmp.ne.s32.totalorder %s282, %s283
      %p292 = scmp.eq.s32.totalorder %s46, 0
      %p293 = por %p291, %p292
      %p294 = scmp.ne.s32.totalorder %s282, %s283
      %p295 = scmp.eq.s32.totalorder %s47, 2
      %p296 = por %p294, %p295
      %p298 = scmp.ne.s32.totalorder %s283, %s297
      %p299 = scmp.eq.s32.totalorder %s47, 0
      %p300 = por %p298, %p299
      %s302 = sadd.s32 %s301, 1
      %p305 = scmp.eq.s32.totalorder %s41, 2
      %p306 = scmp.ne.s32.totalorder %s301, %s303
      %p307 = scmp.eq.s32.totalorder %s41, 0
      %p308 = por %p306, %p307
      %p309 = scmp.ne.s32.totalorder %s301, %s303
      %p310 = scmp.eq.s32.totalorder %s46, 2
      %p311 = por %p309, %p310
      %p312 = scmp.ne.s32.totalorder %s303, %s304
      %p313 = scmp.eq.s32.totalorder %s46, 0
      %p314 = por %p312, %p313
      %p315 = scmp.ne.s32.totalorder %s303, %s304
      %p316 = scmp.eq.s32.totalorder %s47, 2
      %p317 = por %p315, %p316
      %p319 = scmp.ne.s32.totalorder %s304, %s318
      %p320 = scmp.eq.s32.totalorder %s47, 0
      %p321 = por %p319, %p320
      %s323 = sadd.s32 %s322, 1
      %p326 = scmp.eq.s32.totalorder %s41, 2
      %p327 = scmp.ne.s32.totalorder %s322, %s324
      %p328 = scmp.eq.s32.totalorder %s41, 0
      %p329 = por %p327, %p328
      %p330 = scmp.ne.s32.totalorder %s322, %s324
      %p331 = scmp.eq.s32.totalorder %s46, 2
      %p332 = por %p330, %p331
      %p333 = scmp.ne.s32.totalorder %s324, %s325
      %p334 = scmp.eq.s32.totalorder %s46, 0
      %p335 = por %p333, %p334
      %p336 = scmp.ne.s32.totalorder %s324, %s325
      %p337 = scmp.eq.s32.totalorder %s47, 2
      %p338 = por %p336, %p337
      %p340 = scmp.ne.s32.totalorder %s325, %s339
      %p341 = scmp.eq.s32.totalorder %s47, 0
      %p342 = por %p340, %p341
      %s344 = sadd.s32 %s343, 1
      %p347 = scmp.eq.s32.totalorder %s41, 2
      %p348 = scmp.ne.s32.totalorder %s343, %s345
      %p349 = scmp.eq.s32.totalorder %s41, 0
      %p350 = por %p348, %p349
      %p351 = scmp.ne.s32.totalorder %s343, %s345
      %p352 = scmp.eq.s32.totalorder %s46, 2
      %p353 = por %p351, %p352
      %p354 = scmp.ne.s32.totalorder %s345, %s346
      %p355 = scmp.eq.s32.totalorder %s46, 0
      %p356 = por %p354, %p355
      %p357 = scmp.ne.s32.totalorder %s345, %s346
      %p358 = scmp.eq.s32.totalorder %s47, 2
      %p359 = por %p357, %p358
      %p361 = scmp.ne.s32.totalorder %s346, %s360
      %p362 = scmp.eq.s32.totalorder %s47, 0
      %p363 = por %p361, %p362
      %s364 = ssub.s32 %s41, %s48
      %p365 = scmp.eq.s32.totalorder %s364, 0
      %s367 = sadd.s32 %s366, 1
      %s368 = scalar_select %p365, %s366, %s367
      %p371 = pneg %p365
      %p372 = scmp.eq.s32.totalorder %s41, 2
      %p373 = por %p371, %p372
      %p374 = scmp.ne.s32.totalorder %s366, %s369
      %p375 = scmp.eq.s32.totalorder %s41, 0
      %p376 = por %p374, %p375
      %p377 = scmp.ne.s32.totalorder %s366, %s369
      %p378 = scmp.eq.s32.totalorder %s46, 2
      %p379 = por %p377, %p378
      %p380 = scmp.ne.s32.totalorder %s369, %s370
      %p381 = scmp.eq.s32.totalorder %s46, 0
      %p382 = por %p380, %p381
      %p383 = scmp.ne.s32.totalorder %s369, %s370
      %p384 = scmp.eq.s32.totalorder %s47, 2
      %p385 = por %p383, %p384
      %p387 = scmp.ne.s32.totalorder %s370, %s386
      %p388 = scmp.eq.s32.totalorder %s47, 0
      %p389 = por %p387, %p388
      %s390 = ssub.s32 %s41, %s48
      %p391 = scmp.eq.s32.totalorder %s390, 0
      %s393 = sadd.s32 %s392, 1
      %s394 = scalar_select %p391, %s392, %s393
      %p397 = pneg %p391
      %p398 = scmp.eq.s32.totalorder %s41, 2
      %p399 = por %p397, %p398
      %p400 = scmp.ne.s32.totalorder %s392, %s395
      %p401 = scmp.eq.s32.totalorder %s41, 0
      %p402 = por %p400, %p401
      %p403 = scmp.ne.s32.totalorder %s392, %s395
      %p404 = scmp.eq.s32.totalorder %s46, 2
      %p405 = por %p403, %p404
      %p406 = scmp.ne.s32.totalorder %s395, %s396
      %p407 = scmp.eq.s32.totalorder %s46, 0
      %p408 = por %p406, %p407
      %p409 = scmp.ne.s32.totalorder %s395, %s396
      %p410 = scmp.eq.s32.totalorder %s47, 2
      %p411 = por %p409, %p410
      %p413 = scmp.ne.s32.totalorder %s396, %s412
      %p414 = scmp.eq.s32.totalorder %s47, 0
      %p415 = por %p413, %p414
      %s417 = sadd.s32 %s416, 1
      %p420 = scmp.eq.s32.totalorder %s41, 2
      %p421 = scmp.ne.s32.totalorder %s416, %s418
      %p422 = scmp.eq.s32.totalorder %s41, 0
      %p423 = por %p421, %p422
      %p424 = scmp.ne.s32.totalorder %s416, %s418
      %p425 = scmp.eq.s32.totalorder %s46, 2
      %p426 = por %p424, %p425
      %p427 = scmp.ne.s32.totalorder %s418, %s419
      %p428 = scmp.eq.s32.totalorder %s46, 0
      %p429 = por %p427, %p428
      %p430 = scmp.ne.s32.totalorder %s418, %s419
      %p431 = scmp.eq.s32.totalorder %s47, 2
      %p432 = por %p430, %p431
      %p434 = scmp.ne.s32.totalorder %s419, %s433
      %p435 = scmp.eq.s32.totalorder %s47, 0
      %p436 = por %p434, %p435
      %s438 = sadd.s32 %s437, 1
      %p441 = scmp.eq.s32.totalorder %s41, 2
      %p442 = scmp.ne.s32.totalorder %s437, %s439
      %p443 = scmp.eq.s32.totalorder %s41, 0
      %p444 = por %p442, %p443
      %p445 = scmp.ne.s32.totalorder %s437, %s439
      %p446 = scmp.eq.s32.totalorder %s46, 2
      %p447 = por %p445, %p446
      %p448 = scmp.ne.s32.totalorder %s439, %s440
      %p449 = scmp.eq.s32.totalorder %s46, 0
      %p450 = por %p448, %p449
      %p451 = scmp.ne.s32.totalorder %s439, %s440
      %p452 = scmp.eq.s32.totalorder %s47, 2
      %p453 = por %p451, %p452
      %p455 = scmp.ne.s32.totalorder %s440, %s454
      %p456 = scmp.eq.s32.totalorder %s47, 0
      %p457 = por %p455, %p456
      %s459 = sadd.s32 %s458, 1
      %p462 = scmp.eq.s32.totalorder %s41, 2
      %p463 = scmp.ne.s32.totalorder %s458, %s460
      %p464 = scmp.eq.s32.totalorder %s41, 0
      %p465 = por %p463, %p464
      %p466 = scmp.ne.s32.totalorder %s458, %s460
      %p467 = scmp.eq.s32.totalorder %s46, 2
      %p468 = por %p466, %p467
      %p469 = scmp.ne.s32.totalorder %s460, %s461
      %p470 = scmp.eq.s32.totalorder %s46, 0
      %p471 = por %p469, %p470
      %p472 = scmp.ne.s32.totalorder %s460, %s461
      %p473 = scmp.eq.s32.totalorder %s47, 2
      %p474 = por %p472, %p473
      %p476 = scmp.ne.s32.totalorder %s461, %s475
      %p477 = scmp.eq.s32.totalorder %s47, 0
      %p478 = por %p476, %p477
      %s479 = ssub.s32 %s41, %s48
      %p480 = scmp.eq.s32.totalorder %s479, 0
      %s482 = sadd.s32 %s481, 1
      %s483 = scalar_select %p480, %s481, %s482
      %p486 = pneg %p480
      %p487 = scmp.eq.s32.totalorder %s41, 2
      %p488 = por %p486, %p487
      %p489 = scmp.ne.s32.totalorder %s481, %s484
      %p490 = scmp.eq.s32.totalorder %s41, 0
      %p491 = por %p489, %p490
      %p492 = scmp.ne.s32.totalorder %s481, %s484
      %p493 = scmp.eq.s32.totalorder %s46, 2
      %p494 = por %p492, %p493
      %p495 = scmp.ne.s32.totalorder %s484, %s485
      %p496 = scmp.eq.s32.totalorder %s46, 0
      %p497 = por %p495, %p496
      %p498 = scmp.ne.s32.totalorder %s484, %s485
      %p499 = scmp.eq.s32.totalorder %s47, 2
      %p500 = por %p498, %p499
      %p502 = scmp.ne.s32.totalorder %s485, %s501
      %p503 = scmp.eq.s32.totalorder %s47, 0
      %p504 = por %p502, %p503
      %s506 = sadd.s32 %s505, 1
      %p509 = scmp.eq.s32.totalorder %s41, 2
      %p510 = scmp.ne.s32.totalorder %s505, %s507
      %p511 = scmp.eq.s32.totalorder %s41, 0
      %p512 = por %p510, %p511
      %p513 = scmp.ne.s32.totalorder %s505, %s507
      %p514 = scmp.eq.s32.totalorder %s46, 2
      %p515 = por %p513, %p514
      %p516 = scmp.ne.s32.totalorder %s507, %s508
      %p517 = scmp.eq.s32.totalorder %s46, 0
      %p518 = por %p516, %p517
      %p519 = scmp.ne.s32.totalorder %s507, %s508
      %p520 = scmp.eq.s32.totalorder %s47, 2
      %p521 = por %p519, %p520
      %p523 = scmp.ne.s32.totalorder %s508, %s522
      %p524 = scmp.eq.s32.totalorder %s47, 0
      %p525 = por %p523, %p524
      %p526 = scmp.le.s32.totalorder 1, %s41
      %p527 = scmp.lt.s32.totalorder %s41, 4
      %p528 = pnand %p526, %p527
      %p529 = pneg %p528
      // Predicated region
      $region9: #{attention_decoder_forward.1} parent=5 // pred_check
        _
      $region10: #{attention_decoder_forward.1} parent=5 // pred_check_branch
        %531 = sbr.rel (%p528) target = $region12
      $region11: #{attention_decoder_forward.1} parent=5 // pred_region
        %s532 = ssub.s32 %s41, 1
        // Predicated region
        $region13: #{attention_decoder_forward.1} parent=11 // pred_check
          %p533 = pneg %p62
        $region14: #{attention_decoder_forward.1} parent=11 // pred_check_branch
          %535 = sbr.rel (%p533) target = $region16
        $region15: #{attention_decoder_forward.1} parent=11 // pred_region
          _
        $region16: #{attention_decoder_forward.1} parent=11 // pred_fallthru
          _
        // Predicated region
        $region17: #{attention_decoder_forward.1} parent=11 // pred_check
          %p536 = pneg %p83
        $region18: #{attention_decoder_forward.1} parent=11 // pred_check_branch
          %538 = sbr.rel (%p536) target = $region20
        $region19: #{attention_decoder_forward.1} parent=11 // pred_region
          _
        $region20: #{attention_decoder_forward.1} parent=11 // pred_fallthru
          _
        // Predicated region
        $region21: #{attention_decoder_forward.1} parent=11 // pred_check
          %p539 = pneg %p104
        $region22: #{attention_decoder_forward.1} parent=11 // pred_check_branch
          %541 = sbr.rel (%p539) target = $region24
        $region23: #{attention_decoder_forward.1} parent=11 // pred_region
          _
        $region24: #{attention_decoder_forward.1} parent=11 // pred_fallthru
          _
        // Predicated region
        $region25: #{attention_decoder_forward.1} parent=11 // pred_check
          %p542 = pneg %p125
        $region26: #{attention_decoder_forward.1} parent=11 // pred_check_branch
          %544 = sbr.rel (%p542) target = $region28
        $region27: #{attention_decoder_forward.1} parent=11 // pred_region
          _
        $region28: #{attention_decoder_forward.1} parent=11 // pred_fallthru
          _
        // Predicated region
        $region29: #{attention_decoder_forward.1} parent=11 // pred_check
          %p545 = pneg %p146
        $region30: #{attention_decoder_forward.1} parent=11 // pred_check_branch
          %547 = sbr.rel (%p545) target = $region32
        $region31: #{attention_decoder_forward.1} parent=11 // pred_region
          _
        $region32: #{attention_decoder_forward.1} parent=11 // pred_fallthru
          _
        // Predicated region
        $region33: #{attention_decoder_forward.1} parent=11 // pred_check
          %p548 = pneg %p167
        $region34: #{attention_decoder_forward.1} parent=11 // pred_check_branch
          %550 = sbr.rel (%p548) target = $region36
        $region35: #{attention_decoder_forward.1} parent=11 // pred_region
          _
        $region36: #{attention_decoder_forward.1} parent=11 // pred_fallthru
          _
        // Predicated region
        $region37: #{attention_decoder_forward.1} parent=11 // pred_check
          %p551 = pneg %p188
        $region38: #{attention_decoder_forward.1} parent=11 // pred_check_branch
          %553 = sbr.rel (%p551) target = $region40
        $region39: #{attention_decoder_forward.1} parent=11 // pred_region
          _
        $region40: #{attention_decoder_forward.1} parent=11 // pred_fallthru
          _
        // Predicated region
        $region41: #{attention_decoder_forward.1} parent=11 // pred_check
          %p554 = pneg %p209
        $region42: #{attention_decoder_forward.1} parent=11 // pred_check_branch
          %556 = sbr.rel (%p554) target = $region44
        $region43: #{attention_decoder_forward.1} parent=11 // pred_region
          _
        $region44: #{attention_decoder_forward.1} parent=11 // pred_fallthru
          _
        // Predicated region
        $region45: #{attention_decoder_forward.1} parent=11 // pred_check
          %p557 = pneg %p230
        $region46: #{attention_decoder_forward.1} parent=11 // pred_check_branch
          %559 = sbr.rel (%p557) target = $region48
        $region47: #{attention_decoder_forward.1} parent=11 // pred_region
          _
        $region48: #{attention_decoder_forward.1} parent=11 // pred_fallthru
          _
        // Predicated region
        $region49: #{attention_decoder_forward.1} parent=11 // pred_check
          %p560 = pneg %p251
        $region50: #{attention_decoder_forward.1} parent=11 // pred_check_branch
          %562 = sbr.rel (%p560) target = $region52
        $region51: #{attention_decoder_forward.1} parent=11 // pred_region
          _
        $region52: #{attention_decoder_forward.1} parent=11 // pred_fallthru
          _
        // Predicated region
        $region53: #{attention_decoder_forward.1} parent=11 // pred_check
          %p563 = pneg %p272
        $region54: #{attention_decoder_forward.1} parent=11 // pred_check_branch
          %565 = sbr.rel (%p563) target = $region56
        $region55: #{attention_decoder_forward.1} parent=11 // pred_region
          _
        $region56: #{attention_decoder_forward.1} parent=11 // pred_fallthru
          _
        // Predicated region
        $region57: #{attention_decoder_forward.1} parent=11 // pred_check
          %p566 = pneg %p293
        $region58: #{attention_decoder_forward.1} parent=11 // pred_check_branch
          %568 = sbr.rel (%p566) target = $region60
        $region59: #{attention_decoder_forward.1} parent=11 // pred_region
          _
        $region60: #{attention_decoder_forward.1} parent=11 // pred_fallthru
          _
        // Predicated region
        $region61: #{attention_decoder_forward.1} parent=11 // pred_check
          %p569 = pneg %p314
        $region62: #{attention_decoder_forward.1} parent=11 // pred_check_branch
          %571 = sbr.rel (%p569) target = $region64
        $region63: #{attention_decoder_forward.1} parent=11 // pred_region
          _
        $region64: #{attention_decoder_forward.1} parent=11 // pred_fallthru
          _
        // Predicated region
        $region65: #{attention_decoder_forward.1} parent=11 // pred_check
          %p572 = pneg %p335
        $region66: #{attention_decoder_forward.1} parent=11 // pred_check_branch
          %574 = sbr.rel (%p572) target = $region68
        $region67: #{attention_decoder_forward.1} parent=11 // pred_region
          _
        $region68: #{attention_decoder_forward.1} parent=11 // pred_fallthru
          _
        // Predicated region
        $region69: #{attention_decoder_forward.1} parent=11 // pred_check
          %p575 = pneg %p356
        $region70: #{attention_decoder_forward.1} parent=11 // pred_check_branch
          %577 = sbr.rel (%p575) target = $region72
        $region71: #{attention_decoder_forward.1} parent=11 // pred_region
          _
        $region72: #{attention_decoder_forward.1} parent=11 // pred_fallthru
          _
        // Predicated region
        $region73: #{attention_decoder_forward.1} parent=11 // pred_check
          %p578 = pneg %p429
        $region74: #{attention_decoder_forward.1} parent=11 // pred_check_branch
          %580 = sbr.rel (%p578) target = $region76
        $region75: #{attention_decoder_forward.1} parent=11 // pred_region
          _
        $region76: #{attention_decoder_forward.1} parent=11 // pred_fallthru
          _
        // Predicated region
        $region77: #{attention_decoder_forward.1} parent=11 // pred_check
          %p581 = pneg %p450
        $region78: #{attention_decoder_forward.1} parent=11 // pred_check_branch
          %583 = sbr.rel (%p581) target = $region80
        $region79: #{attention_decoder_forward.1} parent=11 // pred_region
          _
        $region80: #{attention_decoder_forward.1} parent=11 // pred_fallthru
          _
        // Predicated region
        $region81: #{attention_decoder_forward.1} parent=11 // pred_check
          %p584 = pneg %p471
        $region82: #{attention_decoder_forward.1} parent=11 // pred_check_branch
          %586 = sbr.rel (%p584) target = $region84
        $region83: #{attention_decoder_forward.1} parent=11 // pred_region
          _
        $region84: #{attention_decoder_forward.1} parent=11 // pred_fallthru
          _
      $region12: #{attention_decoder_forward.1} parent=5 // pred_fallthru
        _
      %p587 = scmp.lt.s32.totalorder %s41, 3
      // Predicated region
      $region85: #{attention_decoder_forward.1} parent=5 // pred_check
        %p588 = pneg %p587
      $region86: #{attention_decoder_forward.1} parent=5 // pred_check_branch
        %590 = sbr.rel (%p588) target = $region88
      $region87: #{attention_decoder_forward.1} parent=5 // pred_region
        // Predicated region
        $region89: #{attention_decoder_forward.1} parent=87 // pred_check
          %p591 = pneg %p376
        $region90: #{attention_decoder_forward.1} parent=87 // pred_check_branch
          %593 = sbr.rel (%p591) target = $region92
        $region91: #{attention_decoder_forward.1} parent=87 // pred_region
          %s594 = sand.u32 %s366, 1
          %s595 = sand.u32 %s366, 1
          %s596 = smul.addr %s595, 16
          %s597 = scalar_lea.vmem [#allocation10], %s596
          %s598 = smul.addr %s41, 4
          %s599 = scalar_lea.vmem %s17, %s598
          // Predicated region
          $region93: #{attention_decoder_forward.1} parent=91 // pred_check
            _
          $region94: #{attention_decoder_forward.1} parent=91 // pred_check_branch
            %601 = sbr.rel (0) target = $region96
          $region95: #{attention_decoder_forward.1} parent=91 // pred_region
            // Predicated region
            $region97: #{attention_decoder_forward.1} parent=95 // pred_check
              _
            $region98: #{attention_decoder_forward.1} parent=95 // pred_check_branch
              %603 = sbr.rel target = $region100
            $region99: #{attention_decoder_forward.1} parent=95 // pred_region
              // Predicated region
              $region112: #{attention_decoder_forward.1} parent=99 // pred_check
                _
              $region113: #{attention_decoder_forward.1} parent=99 // pred_check_branch
                %624 = sbr.rel (0) target = $region115
              $region114: #{attention_decoder_forward.1} parent=99 // pred_region
                loop: start=0, step=1, limit=1
                $region116: #{attention_decoder_forward.1} parent=114 // loop_pre_header
                  _
                $region117: #{attention_decoder_forward.1} parent=114 // loop_header
                  %s626 = sphi 0, %s630
                  %p627 = scmp.ge.s32.totalorder %s626, 1
                  %s631 = sphi %s599, %s599
                  %s632 = sphi %s597, %s597
                $region118: #{attention_decoder_forward.1} parent=114 // loop_header_branch
                  %629 = sbr.rel (%p627) target = $region122
                $region119: #{attention_decoder_forward.1} parent=114 // loop_body
                  _
                $region120: #{attention_decoder_forward.1} parent=114 // loop_footer
                  %s630 = sadd.s32 1, %s626
                $region121: #{attention_decoder_forward.1} parent=114 // loop_footer_branch
                  %625 = sbr.rel target = $region117
                $region122: #{attention_decoder_forward.1} parent=114 // loop_exit
                  _
                loop: start=0, step=1, limit=1
                $region123: #{attention_decoder_forward.1} parent=114 // loop_pre_header
                  _
                $region124: #{attention_decoder_forward.1} parent=114 // loop_header
                  %s635 = sphi 0, %s639
                  %p636 = scmp.ge.s32.totalorder %s635, 1
                  %s640 = sphi %s599, %s599
                  %s641 = sphi %s597, %s597
                $region125: #{attention_decoder_forward.1} parent=114 // loop_header_branch
                  %638 = sbr.rel (%p636) target = $region129
                $region126: #{attention_decoder_forward.1} parent=114 // loop_body
                  %v642 = vld [vmem:[%s640] sm:$0xf]
                  %643 = vst [vmem:[%s641] sm:$0xf] %v642
                  %v644 = vld [vmem:[%s640 + $0xc] sm:$0xf]
                  %645 = vst [vmem:[%s641 + $0x4] sm:$0xf] %v644
                  %v646 = vld [vmem:[%s640 + $0x18] sm:$0xf]
                  %647 = vst [vmem:[%s641 + $0x8] sm:$0xf] %v646
                  %v648 = vld [vmem:[%s640 + $0x24] sm:$0xf]
                  %649 = vst [vmem:[%s641 + $0xc] sm:$0xf] %v648
                $region127: #{attention_decoder_forward.1} parent=114 // loop_footer
                  %s639 = sadd.s32 1, %s635
                $region128: #{attention_decoder_forward.1} parent=114 // loop_footer_branch
                  %634 = sbr.rel target = $region124
                $region129: #{attention_decoder_forward.1} parent=114 // loop_exit
                  _
              $region115: #{attention_decoder_forward.1} parent=99 // pred_fallthru
                _
            $region100: #{attention_decoder_forward.1} parent=95 // pred_fallthru
              _
            // Predicated region
            $region101: #{attention_decoder_forward.1} parent=95 // pred_check
              _
            $region102: #{attention_decoder_forward.1} parent=95 // pred_check_branch
              %605 = sbr.rel (0) target = $region104
            $region103: #{attention_decoder_forward.1} parent=95 // pred_region
              loop: start=0, step=1, limit=1
              $region105: #{attention_decoder_forward.1} parent=103 // loop_pre_header
                _
              $region106: #{attention_decoder_forward.1} parent=103 // loop_header
                %s608 = sphi 0, %s612
                %p609 = scmp.ge.s32.totalorder %s608, 1
                %s613 = sphi %s599, %s599
                %s614 = sphi %s597, %s597
              $region107: #{attention_decoder_forward.1} parent=103 // loop_header_branch
                %611 = sbr.rel (%p609) target = $region111
              $region108: #{attention_decoder_forward.1} parent=103 // loop_body
                %v615 = vld [vmem:[%s613] sm:$0xf]
                %616 = vst [vmem:[%s614] sm:$0xf] %v615
                %v617 = vld [vmem:[%s613 + $0xc] sm:$0xf]
                %618 = vst [vmem:[%s614 + $0x4] sm:$0xf] %v617
                %v619 = vld [vmem:[%s613 + $0x18] sm:$0xf]
                %620 = vst [vmem:[%s614 + $0x8] sm:$0xf] %v619
                %v621 = vld [vmem:[%s613 + $0x24] sm:$0xf]
                %622 = vst [vmem:[%s614 + $0xc] sm:$0xf] %v621
              $region109: #{attention_decoder_forward.1} parent=103 // loop_footer
                %s612 = sadd.s32 1, %s608
              $region110: #{attention_decoder_forward.1} parent=103 // loop_footer_branch
                %607 = sbr.rel target = $region106
              $region111: #{attention_decoder_forward.1} parent=103 // loop_exit
                _
            $region104: #{attention_decoder_forward.1} parent=95 // pred_fallthru
              _
          $region96: #{attention_decoder_forward.1} parent=91 // pred_fallthru
            _
          %650 = vnop
        $region92: #{attention_decoder_forward.1} parent=87 // pred_fallthru
          _
        // Predicated region
        $region130: #{attention_decoder_forward.1} parent=87 // pred_check
          %p651 = pneg %p402
        $region131: #{attention_decoder_forward.1} parent=87 // pred_check_branch
          %653 = sbr.rel (%p651) target = $region133
        $region132: #{attention_decoder_forward.1} parent=87 // pred_region
          %p654 = scmp.lt.s32.totalorder %s41, 2
          %s655 = scalar_select %p654, %s41, 2
          %s656 = scalar_lea.vmem %s18, %s655
        $region133: #{attention_decoder_forward.1} parent=87 // pred_fallthru
          _
      $region88: #{attention_decoder_forward.1} parent=5 // pred_fallthru
        _
      %p657 = scmp.le.s32.totalorder 1, %s41
      %p658 = scmp.lt.s32.totalorder %s41, 4
      %p659 = pnand %p657, %p658
      %p660 = pneg %p659
      // Predicated region
      $region134: #{attention_decoder_forward.1} parent=5 // pred_check
        _
      $region135: #{attention_decoder_forward.1} parent=5 // pred_check_branch
        %662 = sbr.rel (%p659) target = $region137
      $region136: #{attention_decoder_forward.1} parent=5 // pred_region
        %s663 = ssub.s32 %s41, 1
        %s664 = sand.u32 %s369, 1
        %s665 = sand.u32 %s369, 1
        %s666 = smul.addr %s665, 16
        %s667 = scalar_lea.vmem [#allocation10], %s666
        // Predicated region
        $region138: #{attention_decoder_forward.1} parent=136 // pred_check
          %p668 = pneg %p382
        $region139: #{attention_decoder_forward.1} parent=136 // pred_check_branch
          %670 = sbr.rel (%p668) target = $region141
        $region140: #{attention_decoder_forward.1} parent=136 // pred_region
          _
        $region141: #{attention_decoder_forward.1} parent=136 // pred_fallthru
          _
        %p671 = pneg %p62
        %p672 = pneg %p59
        %p673 = pneg %p83
        %p674 = pneg %p80
        %p675 = pneg %p104
        %p676 = pneg %p101
        %p677 = pneg %p125
        %p678 = pneg %p122
        %p679 = pneg %p146
        %p680 = pneg %p143
        %p681 = pneg %p167
        %p682 = pneg %p164
        %p683 = pneg %p188
        %p684 = pneg %p185
        %p685 = pneg %p209
        %p686 = pneg %p206
        %p687 = pneg %p230
        %p688 = pneg %p227
        %p689 = pneg %p251
        %p690 = pneg %p248
        %p691 = pneg %p272
        %p692 = pneg %p269
        %p693 = pneg %p293
        %p694 = pneg %p290
        %p695 = pneg %p314
        %p696 = pneg %p311
        %p697 = pneg %p335
        %p698 = pneg %p332
        %p699 = pneg %p356
        %p700 = pneg %p353
        %s701 = sand.u32 %s369, 1
        %s702 = sand.u32 %s369, 1
        %s703 = smul.addr %s702, 16
        %s704 = scalar_lea.vmem [#allocation10], %s703
        %p705 = pneg %p382
        %p706 = pneg %p379
        %p707 = scmp.lt.s32.totalorder %s46, 2
        %s708 = scalar_select %p707, %s46, 2
        %s709 = scalar_lea.vmem %s18, %s708
        %p710 = pneg %p408
        %p711 = pneg %p405
        %p712 = pneg %p429
        %p713 = pneg %p426
        %p714 = pneg %p450
        %p715 = pneg %p447
        %p716 = pneg %p471
        %p717 = pneg %p468
        %p718 = pneg %p497
        %p719 = pneg %p494
        %s720 = sand.u32 %s484, 1
        %s721 = scalar_lea.sflag [#allocation12], %s720
        %s722 = sand.u32 %s484, 1
        %s723 = smul.addr %s722, 2
        %s724 = scalar_lea.vmem [#allocation11], %s723
        %p725 = pneg %p518
        %p726 = pneg %p515
        %p727 = scmp.lt.s32.totalorder %s46, 2
        %s728 = scalar_select %p727, %s46, 2
        %s729 = scalar_lea.vmem %s18, %s728
        %p731 = scmp.eq.s32.totalorder %s46, 0
        // Predicated region
        $region142: #{attention_decoder_forward.1} parent=136 // pred_check
          %p732 = pneg %p731
        $region143: #{attention_decoder_forward.1} parent=136 // pred_check_branch
          %734 = sbr.rel (%p732) target = $region145
        $region144: #{attention_decoder_forward.1} parent=136 // pred_region
          %s735 = sld [smem:[#allocation8]]
          %s736 = scalar_lea.vmem %s7, %s735
          %p738 = scmp.lt.u32.totalorder 1, 8
          %p739 = pneg %p738
          // Predicated region
          $region146: #{attention_decoder_forward.1} parent=144 // pred_check
            _
          $region147: #{attention_decoder_forward.1} parent=144 // pred_check_branch
            %741 = sbr.rel (%p738) target = $region149
          $region148: #{attention_decoder_forward.1} parent=144 // pred_region
            %s756 = sand.u32 1, 7
            %p757 = scmp.eq.s32.totalorder %s756, 0
            %p758 = pneg %p757
            // Predicated region
            $region161: #{attention_decoder_forward.1} parent=148 // pred_check
              _
            $region162: #{attention_decoder_forward.1} parent=148 // pred_check_branch
              %760 = sbr.rel (%p757) target = $region164
            $region163: #{attention_decoder_forward.1} parent=148 // pred_region
              %s761 = sand.u32 1, 7
              %s762 = ssub.s32 1, %s761
              %s763 = scalar_lea.vmem %s736, %s762
              %s764 = ssub.s32 1, %s761
              %s765 = scalar_lea.vmem [#allocation2], %s764
              %s766 = sshllo.u32 0, %s761
              loop: start=0, step=1, limit=1
              $region165: #{attention_decoder_forward.1} parent=163 // loop_pre_header
                _
              $region166: #{attention_decoder_forward.1} parent=163 // loop_header
                %s768 = sphi 0, %s772
                %p769 = scmp.ge.s32.totalorder %s768, 1
                %s773 = sphi %s763, %s763
                %s774 = sphi %s765, %s765
              $region167: #{attention_decoder_forward.1} parent=163 // loop_header_branch
                %771 = sbr.rel (%p769) target = $region171
              $region168: #{attention_decoder_forward.1} parent=163 // loop_body
                %v775 = vld [vmem:[%s773] sm:%s766]
                %776 = vst [vmem:[%s774] sm:%s766] %v775
              $region169: #{attention_decoder_forward.1} parent=163 // loop_footer
                %s772 = sadd.s32 1, %s768
              $region170: #{attention_decoder_forward.1} parent=163 // loop_footer_branch
                %767 = sbr.rel target = $region166
              $region171: #{attention_decoder_forward.1} parent=163 // loop_exit
                _
            $region164: #{attention_decoder_forward.1} parent=148 // pred_fallthru
              _
          $region149: #{attention_decoder_forward.1} parent=144 // pred_fallthru
            _
          // Predicated region
          $region150: #{attention_decoder_forward.1} parent=144 // pred_check
            %p742 = pneg %p738
          $region151: #{attention_decoder_forward.1} parent=144 // pred_check_branch
            %744 = sbr.rel (%p742) target = $region153
          $region152: #{attention_decoder_forward.1} parent=144 // pred_region
            %s745 = sshllo.u32 0, 1
            loop: start=0, step=1, limit=1
            $region154: #{attention_decoder_forward.1} parent=152 // loop_pre_header
              _
            $region155: #{attention_decoder_forward.1} parent=152 // loop_header
              %s747 = sphi 0, %s751
              %p748 = scmp.ge.s32.totalorder %s747, 1
              %s752 = sphi %s736, %s736
              %s753 = sphi [#allocation2], [#allocation2]
            $region156: #{attention_decoder_forward.1} parent=152 // loop_header_branch
              %750 = sbr.rel (%p748) target = $region160
            $region157: #{attention_decoder_forward.1} parent=152 // loop_body
              %v754 = vld [vmem:[%s752] sm:%s745]
              %755 = vst [vmem:[%s753] sm:%s745] %v754
            $region158: #{attention_decoder_forward.1} parent=152 // loop_footer
              %s751 = sadd.s32 1, %s747
            $region159: #{attention_decoder_forward.1} parent=152 // loop_footer_branch
              %746 = sbr.rel target = $region155
            $region160: #{attention_decoder_forward.1} parent=152 // loop_exit
              _
          $region153: #{attention_decoder_forward.1} parent=144 // pred_fallthru
            _
          // Predicated region
          $region172: #{attention_decoder_forward.1} parent=144 // pred_check
            _
          $region173: #{attention_decoder_forward.1} parent=144 // pred_check_branch
            %779 = sbr.rel (0) target = $region175
          $region174: #{attention_decoder_forward.1} parent=144 // pred_region
            %780 = vsyncadd [#allocation6], 16
          $region175: #{attention_decoder_forward.1} parent=144 // pred_fallthru
            _
          %s781 = sld [smem:[#allocation8 + $0x1]]
          %s782 = scalar_lea.vmem %s7, %s781
          %s783 = scalar_lea.vmem [#allocation2], 1
          %s784 = scalar_lea.sflag [#allocation6], 1
          %p786 = scmp.lt.u32.totalorder 1, 8
          %p787 = pneg %p786
          // Predicated region
          $region176: #{attention_decoder_forward.1} parent=144 // pred_check
            _
          $region177: #{attention_decoder_forward.1} parent=144 // pred_check_branch
            %789 = sbr.rel (%p786) target = $region179
          $region178: #{attention_decoder_forward.1} parent=144 // pred_region
            %s804 = sand.u32 1, 7
            %p805 = scmp.eq.s32.totalorder %s804, 0
            %p806 = pneg %p805
            // Predicated region
            $region191: #{attention_decoder_forward.1} parent=178 // pred_check
              _
            $region192: #{attention_decoder_forward.1} parent=178 // pred_check_branch
              %808 = sbr.rel (%p805) target = $region194
            $region193: #{attention_decoder_forward.1} parent=178 // pred_region
              %s809 = sand.u32 1, 7
              %s810 = ssub.s32 1, %s809
              %s811 = scalar_lea.vmem %s782, %s810
              %s812 = ssub.s32 1, %s809
              %s813 = scalar_lea.vmem %s783, %s812 [#allocation2]
              %s814 = sshllo.u32 0, %s809
              loop: start=0, step=1, limit=1
              $region195: #{attention_decoder_forward.1} parent=193 // loop_pre_header
                _
              $region196: #{attention_decoder_forward.1} parent=193 // loop_header
                %s816 = sphi 0, %s820
                %p817 = scmp.ge.s32.totalorder %s816, 1
                %s821 = sphi %s811, %s811
                %s822 = sphi %s813, %s813
              $region197: #{attention_decoder_forward.1} parent=193 // loop_header_branch
                %819 = sbr.rel (%p817) target = $region201
              $region198: #{attention_decoder_forward.1} parent=193 // loop_body
                %v823 = vld [vmem:[%s821] sm:%s814]
                %824 = vst [vmem:[%s822] sm:%s814] %v823
              $region199: #{attention_decoder_forward.1} parent=193 // loop_footer
                %s820 = sadd.s32 1, %s816
              $region200: #{attention_decoder_forward.1} parent=193 // loop_footer_branch
                %815 = sbr.rel target = $region196
              $region201: #{attention_decoder_forward.1} parent=193 // loop_exit
                _
            $region194: #{attention_decoder_forward.1} parent=178 // pred_fallthru
              _
          $region179: #{attention_decoder_forward.1} parent=144 // pred_fallthru
            _
          // Predicated region
          $region180: #{attention_decoder_forward.1} parent=144 // pred_check
            %p790 = pneg %p786
          $region181: #{attention_decoder_forward.1} parent=144 // pred_check_branch
            %792 = sbr.rel (%p790) target = $region183
          $region182: #{attention_decoder_forward.1} parent=144 // pred_region
            %s793 = sshllo.u32 0, 1
            loop: start=0, step=1, limit=1
            $region184: #{attention_decoder_forward.1} parent=182 // loop_pre_header
              _
            $region185: #{attention_decoder_forward.1} parent=182 // loop_header
              %s795 = sphi 0, %s799
              %p796 = scmp.ge.s32.totalorder %s795, 1
              %s800 = sphi %s782, %s782
              %s801 = sphi %s783, %s783
            $region186: #{attention_decoder_forward.1} parent=182 // loop_header_branch
              %798 = sbr.rel (%p796) target = $region190
            $region187: #{attention_decoder_forward.1} parent=182 // loop_body
              %v802 = vld [vmem:[%s800] sm:%s793]
              %803 = vst [vmem:[%s801] sm:%s793] %v802
            $region188: #{attention_decoder_forward.1} parent=182 // loop_footer
              %s799 = sadd.s32 1, %s795
            $region189: #{attention_decoder_forward.1} parent=182 // loop_footer_branch
              %794 = sbr.rel target = $region185
            $region190: #{attention_decoder_forward.1} parent=182 // loop_exit
              _
          $region183: #{attention_decoder_forward.1} parent=144 // pred_fallthru
            _
          // Predicated region
          $region202: #{attention_decoder_forward.1} parent=144 // pred_check
            _
          $region203: #{attention_decoder_forward.1} parent=144 // pred_check_branch
            %827 = sbr.rel (0) target = $region205
          $region204: #{attention_decoder_forward.1} parent=144 // pred_region
            %828 = vsyncadd %s784, 16
          $region205: #{attention_decoder_forward.1} parent=144 // pred_fallthru
            _
          %s829 = sld [smem:[#allocation8]]
          %s830 = smul.u32 1, 1
          %s831 = sshll.u32 %s830, 4
          %832 = dma.done [#allocation6], %s831
          %s833 = sld [smem:[#allocation8 + $0x1]]
          %s834 = sshll.u32 %s830, 4
          %835 = dma.done %s784, %s834
          %v836 = vld [vmem:[#allocation2] sm:$0x3]
          %v837 = vpack.c.bf16 %v836, %v836
          %v838 = vld [vmem:[%s2] sm:$0x3]
          %v839 = vld [vmem:[%s3] sm:$0x3]
          %v840 = vld [vmem:[%s4] sm:$0x3]
          %v841 = vld [vmem:[%s8] sm:$0xf]
          %v842 = vld [vmem:[%s8 + $0x4] sm:$0xf]
          %v843 = vpack.c.bf16 %v838, %v838
          %v844 = vld [vmem:[%s9] sm:$0xf]
          %v845 = vld [vmem:[%s9 + $0x4] sm:$0xf]
          %v846 = vld [vmem:[%s9 + $0x8] sm:$0xf]
          %v847 = vld [vmem:[%s9 + $0xc] sm:$0xf]
          %v852 = vunpack.c.l.b16 %v844
          %v853 = vunpack.c.l.b16 %v845
          %v854 = vunpack.c.l.b16 %v846
          %v855 = vunpack.c.l.b16 %v847
          %v856 = vpack.c.b16 %v853, %v852
          %v857 = vpack.c.b16 %v855, %v854
          %vm860 = vcmask 261120
          %v862 = vsel %vm860, %v843, 0
          %864 = vmatprep.subr.bf16.mxu0 0
          %865 = vmatpush1.bf16.msra.mxu0 %v856
          %866 = vmatprep.subr.bf16.mxu0 0
          %867 = vmatpush1.bf16.msra.mxu0 %v857
          %868 = vmatprep.subr.bf16.mxu0 0
          %869 = vmatpush1.bf16.msra.mxu0 0
          %870 = vmatprep.subr.bf16.mxu0 0
          %871 = vmatpush1.bf16.msra.mxu0 0
          %872 = vmatprep.subr.bf16.mxu0 0
          %873 = vmatpush1.bf16.msra.mxu0 0
          %874 = vmatprep.subr.bf16.mxu0 0
          %875 = vmatpush1.bf16.msra.mxu0 0
          %876 = vmatprep.subr.bf16.mxu0 0
          %877 = vmatpush1.bf16.msra.mxu0 0
          %878 = vmatprep.subr.bf16.mxu0 0
          %879 = vmatpush1.bf16.msra.mxu0 0
          %880 = vmatprep.subr.bf16.mxu0 0
          %881 = vmatpush1.bf16.msra.mxu0 0
          %882 = vmatprep.subr.bf16.mxu0 0
          %883 = vmatpush1.bf16.msra.mxu0 0
          %884 = vmatprep.subr.bf16.mxu0 0
          %885 = vmatpush1.bf16.msra.mxu0 0
          %886 = vmatprep.subr.bf16.mxu0 0
          %887 = vmatpush1.bf16.msra.mxu0 0
          %888 = vmatprep.subr.bf16.mxu0 0
          %889 = vmatpush1.bf16.msra.mxu0 0
          %890 = vmatprep.subr.bf16.mxu0 0
          %891 = vmatpush1.bf16.msra.mxu0 0
          %892 = vmatprep.subr.bf16.mxu0 0
          %893 = vmatpush1.bf16.msra.mxu0 0
          %894 = vmatprep.subr.bf16.mxu0 0
          %895 = vmatpush1.bf16.msra.mxu0 0
          %896 = vmatprep.mubr.bf16.mxu0 0
          %897 = vmatmul.mubr.bf16.gmra.mrb[0].mxu0 %v862
          %v898 = vpop.f32.mrb[0].mxu0
          %v899 = vadd.f32 0.0, %v898
          %v900 = vpop.f32.mrb[0].mxu0
          %v901 = vpop.f32.mrb[0].mxu0
          %v902 = vpop.f32.mrb[0].mxu0
          %903 = vdwg.mxu0
          %v906 = vunpack.c.l.b16 %v841
          %v907 = vunpack.c.l.b16 %v842
          %v908 = vpack.c.b16 %v907, %v906
          %vm910 = vcmask 130048
          %v912 = vsel %vm910, %v837, 0
          %914 = vmatprep.subr.bf16.mxu0 0
          %915 = vmatpush1.bf16.msra.mxu0 %v908
          %916 = vmatprep.subr.bf16.mxu0 0
          %917 = vmatpush1.bf16.msra.mxu0 0
          %918 = vmatprep.subr.bf16.mxu0 0
          %919 = vmatpush1.bf16.msra.mxu0 0
          %920 = vmatprep.subr.bf16.mxu0 0
          %921 = vmatpush1.bf16.msra.mxu0 0
          %922 = vmatprep.subr.bf16.mxu0 0
          %923 = vmatpush1.bf16.msra.mxu0 0
          %924 = vmatprep.subr.bf16.mxu0 0
          %925 = vmatpush1.bf16.msra.mxu0 0
          %926 = vmatprep.subr.bf16.mxu0 0
          %927 = vmatpush1.bf16.msra.mxu0 0
          %928 = vmatprep.subr.bf16.mxu0 0
          %929 = vmatpush1.bf16.msra.mxu0 0
          %930 = vmatprep.subr.bf16.mxu0 0
          %931 = vmatpush1.bf16.msra.mxu0 0
          %932 = vmatprep.subr.bf16.mxu0 0
          %933 = vmatpush1.bf16.msra.mxu0 0
          %934 = vmatprep.subr.bf16.mxu0 0
          %935 = vmatpush1.bf16.msra.mxu0 0
          %936 = vmatprep.subr.bf16.mxu0 0
          %937 = vmatpush1.bf16.msra.mxu0 0
          %938 = vmatprep.subr.bf16.mxu0 0
          %939 = vmatpush1.bf16.msra.mxu0 0
          %940 = vmatprep.subr.bf16.mxu0 0
          %941 = vmatpush1.bf16.msra.mxu0 0
          %942 = vmatprep.subr.bf16.mxu0 0
          %943 = vmatpush1.bf16.msra.mxu0 0
          %944 = vmatprep.subr.bf16.mxu0 0
          %945 = vmatpush1.bf16.msra.mxu0 0
          %946 = vmatprep.mubr.bf16.mxu0 0
          %947 = vmatmul.mubr.bf16.gmra.mrb[0].mxu0 %v912
          %v948 = vpop.f32.mrb[0].mxu0
          %v949 = vadd.f32 %v899, %v948
          %v950 = vpop.f32.mrb[0].mxu0
          %v951 = vpop.f32.mrb[0].mxu0
          %v952 = vpop.f32.mrb[0].mxu0
          %953 = vdwg.mxu0
          %v954 = vpack.c.bf16 %v839, %v839
          %v955 = vld [vmem:[%s10] sm:$0xf]
          %v956 = vld [vmem:[%s10 + $0x4] sm:$0xf]
          %v957 = vld [vmem:[%s10 + $0x8] sm:$0xf]
          %v958 = vld [vmem:[%s10 + $0xc] sm:$0xf]
          %v963 = vunpack.c.l.b16 %v955
          %v964 = vunpack.c.l.b16 %v956
          %v965 = vunpack.c.l.b16 %v957
          %v966 = vunpack.c.l.b16 %v958
          %v967 = vpack.c.b16 %v964, %v963
          %v968 = vpack.c.b16 %v966, %v965
          %v972 = vsel %vm860, %v954, 0
          %974 = vmatprep.subr.bf16.mxu0 0
          %975 = vmatpush1.bf16.msra.mxu0 %v967
          %976 = vmatprep.subr.bf16.mxu0 0
          %977 = vmatpush1.bf16.msra.mxu0 %v968
          %978 = vmatprep.subr.bf16.mxu0 0
          %979 = vmatpush1.bf16.msra.mxu0 0
          %980 = vmatprep.subr.bf16.mxu0 0
          %981 = vmatpush1.bf16.msra.mxu0 0
          %982 = vmatprep.subr.bf16.mxu0 0
          %983 = vmatpush1.bf16.msra.mxu0 0
          %984 = vmatprep.subr.bf16.mxu0 0
          %985 = vmatpush1.bf16.msra.mxu0 0
          %986 = vmatprep.subr.bf16.mxu0 0
          %987 = vmatpush1.bf16.msra.mxu0 0
          %988 = vmatprep.subr.bf16.mxu0 0
          %989 = vmatpush1.bf16.msra.mxu0 0
          %990 = vmatprep.subr.bf16.mxu0 0
          %991 = vmatpush1.bf16.msra.mxu0 0
          %992 = vmatprep.subr.bf16.mxu0 0
          %993 = vmatpush1.bf16.msra.mxu0 0
          %994 = vmatprep.subr.bf16.mxu0 0
          %995 = vmatpush1.bf16.msra.mxu0 0
          %996 = vmatprep.subr.bf16.mxu0 0
          %997 = vmatpush1.bf16.msra.mxu0 0
          %998 = vmatprep.subr.bf16.mxu0 0
          %999 = vmatpush1.bf16.msra.mxu0 0
          %1000 = vmatprep.subr.bf16.mxu0 0
          %1001 = vmatpush1.bf16.msra.mxu0 0
          %1002 = vmatprep.subr.bf16.mxu0 0
          %1003 = vmatpush1.bf16.msra.mxu0 0
          %1004 = vmatprep.subr.bf16.mxu0 0
          %1005 = vmatpush1.bf16.msra.mxu0 0
          %1006 = vmatprep.mubr.bf16.mxu0 0
          %1007 = vmatmul.mubr.bf16.gmra.mrb[0].mxu0 %v972
          %v1008 = vpop.f32.mrb[0].mxu0
          %v1009 = vadd.f32 0.0, %v1008
          %v1010 = vpop.f32.mrb[0].mxu0
          %v1011 = vpop.f32.mrb[0].mxu0
          %v1012 = vpop.f32.mrb[0].mxu0
          %1013 = vdwg.mxu0
          %v1014 = vadd.f32 %v949, %v1009
          %v1015 = vld [vmem:[%s11] sm:$0x1]
          %v1017 = vlaneseq
          %v1018 = vshrl.u32 %v1017, 7
          %v1019 = vsub.s32 0, %v1018
          %v1020 = vrot.slane %v1015, %v1019
          %v1022 = vadd.f32 %v1014, %v1020
          %v1023 = vxor.u32 %v1022, 2147483648
          %v1024 = vmul.f32 %v1023, 1.442695
          %v1025 = vpow.pop %v1024
          %v1026 = vadd.f32 %v1025, 1.0
          %v1027 = vrcp.pop %v1026
          %v1028 = vmul.f32 1.0, %v1027
          %v1029 = vtanh.pop %v1022
          %1031 = vrot.lane.b32.xlu0 %v840, 32
          %v1032 = vpop.permute.xlu0 %1031
          %v1034 = vmul.f32 %v1028, %v1032
          %1036 = vrot.lane.b32.xlu0 %v1029, 64
          %v1037 = vpop.permute.xlu0 %1036
          %v1039 = vmul.f32 %v1028, %v1037
          %1041 = vrot.lane.b32.xlu0 %v1039, 32
          %v1042 = vpop.permute.xlu0 %1041
          %v1044 = vadd.f32 %v1034, %v1042
          %v1045 = vtanh.pop %v1044
          %1047 = vrot.lane.b32.xlu0 %v1045, 64
          %v1048 = vpop.permute.xlu0 %1047
          %v1050 = vmul.f32 %v1028, %v1048
          %v1051 = vld [vmem:[%s5] sm:$0xff]
          %v1052 = vld [vmem:[%s5 + $0x8] sm:$0xff]
          %v1053 = vld [vmem:[%s6] sm:$0x3]
          %v1054 = vpack.c.bf16 %v1051, %v1051
          %v1055 = vpack.c.bf16 %v1052, %v1052
          %v1056 = vld [vmem:[%s12] sm:$0xf]
          %v1057 = vld [vmem:[%s12 + $0x4] sm:$0xf]
          %v1058 = vld [vmem:[%s12 + $0x8] sm:$0xf]
          %v1059 = vld [vmem:[%s12 + $0xc] sm:$0xf]
          %v1062 = vunpack.c.l.b16 %v1054
          %v1063 = vunpack.c.l.b16 %v1055
          %v1064 = vpack.c.b16 %v1063, %v1062
          %v1069 = vunpack.c.l.b16 %v1056
          %v1070 = vunpack.c.l.b16 %v1057
          %v1071 = vunpack.c.l.b16 %v1058
          %v1072 = vunpack.c.l.b16 %v1059
          %v1073 = vpack.c.b16 %v1070, %v1069
          %v1074 = vpack.c.b16 %v1072, %v1071
          %v1078 = vsel %vm860, %v1064, 0
          %1080 = vmatprep.subr.bf16.mxu0 0
          %1081 = vmatpush1.bf16.msra.mxu0 %v1073
          %1082 = vmatprep.subr.bf16.mxu0 0
          %1083 = vmatpush1.bf16.msra.mxu0 %v1074
          %1084 = vmatprep.subr.bf16.mxu0 0
          %1085 = vmatpush1.bf16.msra.mxu0 0
          %1086 = vmatprep.subr.bf16.mxu0 0
          %1087 = vmatpush1.bf16.msra.mxu0 0
          %1088 = vmatprep.subr.bf16.mxu0 0
          %1089 = vmatpush1.bf16.msra.mxu0 0
          %1090 = vmatprep.subr.bf16.mxu0 0
          %1091 = vmatpush1.bf16.msra.mxu0 0
          %1092 = vmatprep.subr.bf16.mxu0 0
          %1093 = vmatpush1.bf16.msra.mxu0 0
          %1094 = vmatprep.subr.bf16.mxu0 0
          %1095 = vmatpush1.bf16.msra.mxu0 0
          %1096 = vmatprep.subr.bf16.mxu0 0
          %1097 = vmatpush1.bf16.msra.mxu0 0
          %1098 = vmatprep.subr.bf16.mxu0 0
          %1099 = vmatpush1.bf16.msra.mxu0 0
          %1100 = vmatprep.subr.bf16.mxu0 0
          %1101 = vmatpush1.bf16.msra.mxu0 0
          %1102 = vmatprep.subr.bf16.mxu0 0
          %1103 = vmatpush1.bf16.msra.mxu0 0
          %1104 = vmatprep.subr.bf16.mxu0 0
          %1105 = vmatpush1.bf16.msra.mxu0 0
          %1106 = vmatprep.subr.bf16.mxu0 0
          %1107 = vmatpush1.bf16.msra.mxu0 0
          %1108 = vmatprep.subr.bf16.mxu0 0
          %1109 = vmatpush1.bf16.msra.mxu0 0
          %1110 = vmatprep.subr.bf16.mxu0 0
          %1111 = vmatpush1.bf16.msra.mxu0 0
          %1112 = vmatprep.mubr.bf16.mxu0 0
          %1113 = vmatmul.mubr.bf16.gmra.mrb[0].mxu0 %v1078
          %v1114 = vpop.f32.mrb[0].mxu0
          %v1115 = vadd.f32 0.0, %v1114
          %v1116 = vpop.f32.mrb[0].mxu0
          %v1117 = vpop.f32.mrb[0].mxu0
          %v1118 = vadd.f32 0.0, %v1117
          %v1119 = vpop.f32.mrb[0].mxu0
          %1120 = vdwg.mxu0
          %v1121 = vpack.c.bf16 %v1050, %v1050
          %v1122 = vld [vmem:[%s13] sm:$0xf]
          %v1123 = vld [vmem:[%s13 + $0x4] sm:$0xf]
          %v1124 = vld [vmem:[%s13 + $0x8] sm:$0xf]
          %v1125 = vld [vmem:[%s13 + $0xc] sm:$0xf]
          %1127 = vrot.lane.b32.xlu0 %v1121, 32
          %v1128 = vpop.permute.xlu0 %1127
          %v1133 = vunpack.c.l.b16 %v1122
          %v1134 = vunpack.c.l.b16 %v1123
          %v1135 = vunpack.c.l.b16 %v1124
          %v1136 = vunpack.c.l.b16 %v1125
          %v1137 = vpack.c.b16 %v1134, %v1133
          %v1138 = vpack.c.b16 %v1136, %v1135
          %v1142 = vsel %vm860, %v1128, 0
          %1144 = vmatprep.subr.bf16.mxu0 0
          %1145 = vmatpush1.bf16.msra.mxu0 %v1137
          %1146 = vmatprep.subr.bf16.mxu0 0
          %1147 = vmatpush1.bf16.msra.mxu0 %v1138
          %1148 = vmatprep.subr.bf16.mxu0 0
          %1149 = vmatpush1.bf16.msra.mxu0 0
          %1150 = vmatprep.subr.bf16.mxu0 0
          %1151 = vmatpush1.bf16.msra.mxu0 0
          %1152 = vmatprep.subr.bf16.mxu0 0
          %1153 = vmatpush1.bf16.msra.mxu0 0
          %1154 = vmatprep.subr.bf16.mxu0 0
          %1155 = vmatpush1.bf16.msra.mxu0 0
          %1156 = vmatprep.subr.bf16.mxu0 0
          %1157 = vmatpush1.bf16.msra.mxu0 0
          %1158 = vmatprep.subr.bf16.mxu0 0
          %1159 = vmatpush1.bf16.msra.mxu0 0
          %1160 = vmatprep.subr.bf16.mxu0 0
          %1161 = vmatpush1.bf16.msra.mxu0 0
          %1162 = vmatprep.subr.bf16.mxu0 0
          %1163 = vmatpush1.bf16.msra.mxu0 0
          %1164 = vmatprep.subr.bf16.mxu0 0
          %1165 = vmatpush1.bf16.msra.mxu0 0
          %1166 = vmatprep.subr.bf16.mxu0 0
          %1167 = vmatpush1.bf16.msra.mxu0 0
          %1168 = vmatprep.subr.bf16.mxu0 0
          %1169 = vmatpush1.bf16.msra.mxu0 0
          %1170 = vmatprep.subr.bf16.mxu0 0
          %1171 = vmatpush1.bf16.msra.mxu0 0
          %1172 = vmatprep.subr.bf16.mxu0 0
          %1173 = vmatpush1.bf16.msra.mxu0 0
          %1174 = vmatprep.subr.bf16.mxu0 0
          %1175 = vmatpush1.bf16.msra.mxu0 0
          %1176 = vmatprep.mubr.bf16.mxu0 0
          %1177 = vmatmul.mubr.bf16.gmra.mrb[0].mxu0 %v1142
          %v1178 = vpop.f32.mrb[0].mxu0
          %v1179 = vadd.f32 0.0, %v1178
          %v1180 = vpop.f32.mrb[0].mxu0
          %v1181 = vpop.f32.mrb[0].mxu0
          %v1182 = vpop.f32.mrb[0].mxu0
          %1183 = vdwg.mxu0
          %v1186 = vunpack.c.l.s4 1966171168
          %v1187 = vunpack.c.0.s8 %v1186
          %v1188 = vlaneseq
          %v1189 = vshrl.u32 %v1188, 7
          %v1190 = vsub.s32 %v1187, %v1189
          %v1191 = vrot.slane %v1179, %v1190
          %v1192 = vcombine.high %v1191, %v1191
          %v1194 = vunpack.c.l.s4 1966171168
          %v1195 = vunpack.c.0.s8 %v1194
          %v1196 = vlaneseq
          %v1197 = vshrl.u32 %v1196, 7
          %v1198 = vsub.s32 %v1195, %v1197
          %v1199 = vrot.slane %v1191, %v1198
          %v1201 = vunpack.c.l.s4 1966171168
          %v1202 = vunpack.c.0.s8 %v1201
          %v1203 = vlaneseq
          %v1204 = vshrl.u32 %v1203, 7
          %v1205 = vsub.s32 %v1202, %v1204
          %v1206 = vrot.slane %v1192, %v1205
          %v1207 = vlaneseq
          %v1208 = vshrl.u32 %v1207, 7
          %v1209 = vsub.s32 0, %v1208
          %v1210 = vrot.slane %v1199, %v1209
          %v1211 = vlaneseq
          %v1212 = vshrl.u32 %v1211, 7
          %v1213 = vsub.s32 0, %v1212
          %v1214 = vrot.slane %v1206, %v1213
          %v1217 = vadd.f32 %v1115, %v1210
          %v1218 = vadd.f32 %v1118, %v1214
          %v1219 = vlaneseq
          %v1220 = vshrl.u32 %v1219, 7
          %v1221 = vsub.s32 0, %v1220
          %v1222 = vrot.slane %v1053, %v1221
          %1224 = vbcast.lane.b32.xlu0 %v1222, 256
          %v1225 = vpop.permute.xlu0 %1224
          %v1226 = vlaneseq
          %v1227 = vshrl.u32 %v1226, 7
          %v1228 = vsub.s32 1, %v1227
          %v1229 = vrot.slane %v1053, %v1228
          %1231 = vbcast.lane.b32.xlu0 %v1229, 256
          %v1232 = vpop.permute.xlu0 %1231
          %v1233 = vld [vmem:[%s14] sm:$0x1]
          %v1235 = vlaneseq
          %v1236 = vshrl.u32 %v1235, 7
          %v1237 = vsub.s32 0, %v1236
          %v1238 = vrot.slane %v1233, %v1237
          %v1240 = vmul.f32 %v1225, %v1238
          %v1241 = vmul.f32 %v1232, %v1238
          %v1242 = vadd.f32 %v1217, %v1240
          %v1243 = vadd.f32 %v1218, %v1241
          %v1244 = vld [vmem:[%s16] sm:$0x1]
          %v1246 = vlaneseq
          %v1247 = vshrl.u32 %v1246, 7
          %v1248 = vsub.s32 0, %v1247
          %v1249 = vrot.slane %v1244, %v1248
          %v1251 = vadd.f32 %v1242, %v1249
          %v1252 = vadd.f32 %v1243, %v1249
          %v1253 = vtanh.pop %v1251
          %v1254 = vtanh.pop %v1252
          %v1255 = vld [vmem:[%s15] sm:$0x1]
          %v1257 = vlaneseq
          %v1258 = vshrl.u32 %v1257, 7
          %v1259 = vsub.s32 0, %v1258
          %v1260 = vrot.slane %v1255, %v1259
          %v1262 = vmul.f32 %v1253, %v1260
          %v1263 = vmul.f32 %v1254, %v1260
          %v1264 = vsel %vm860, %v1262, 0.0
          %1265 = vadd.xlane.f32.xlu0 %v1264
          %v1266 = vpop.xlane.xlu0 %1265
          %v1267 = vsel %vm860, %v1263, 0.0
          %1268 = vadd.xlane.f32.xlu0 %v1267
          %v1269 = vpop.xlane.xlu0 %1268
          %v1272 = vlaneseq
          %v1273 = vand.u32 %v1272, 127
          %v1274 = vlaneseq
          %v1275 = vshrl.u32 %v1274, 7
          %v1276 = vsub.s32 %v1273, %v1275
          %v1277 = vrot.slane %v1266, %v1276
          %v1278 = vlaneseq
          %v1279 = vshrl.u32 %v1278, 7
          %v1280 = vsub.s32 %v1273, %v1279
          %v1281 = vrot.slane %v1269, %v1280
          %vm1282 = vcmask 1041409
          %v1283 = vsel %vm1282, %v1281, %v1277
          %vm1285 = vcmask 58368
          %v1286 = vsel %vm1285, %v1283, -inf
          %1287 = vmax.xlane.f32.xlu0 %v1286
          %v1288 = vpop.xlane.xlu0 %1287
          %v1290 = vlaneseq
          %v1291 = vshrl.u32 %v1290, 7
          %v1292 = vsub.s32 0, %v1291
          %v1293 = vrot.slane %v1288, %v1292
          %v1294 = vlaneseq
          %v1295 = vshrl.u32 %v1294, 7
          %v1296 = vsub.s32 1, %v1295
          %v1297 = vrot.slane %v1288, %v1296
          %v1300 = vsub.f32 %v1266, %v1293
          %v1301 = vsub.f32 %v1269, %v1297
          %v1302 = vmul.f32 %v1300, 1.442695
          %v1303 = vpow.pop %v1302
          %v1304 = vmul.f32 %v1301, 1.442695
          %v1305 = vpow.pop %v1304
          %1308 = vset.pattern.permute.xlu0 0
          %1309 = vperm.xlu0 %1308, %v1303
          %v1310 = vpop.permute.xlu0 %1309
          %1311 = vset.pattern.permute.xlu0 0
          %1312 = vperm.xlu0 %1311, %v1305
          %v1313 = vpop.permute.xlu0 %1312
          %v1314 = vlaneseq
          %v1315 = vshrl.u32 %v1314, 7
          %v1316 = vsub.s32 %v1273, %v1315
          %v1317 = vrot.slane %v1310, %v1316
          %v1318 = vlaneseq
          %v1319 = vshrl.u32 %v1318, 7
          %v1320 = vsub.s32 %v1273, %v1319
          %v1321 = vrot.slane %v1313, %v1320
          %v1322 = vsel %vm1282, %v1321, %v1317
          %v1324 = vsel %vm1285, %v1322, 0.0
          %1325 = vadd.xlane.f32.xlu0 %v1324
          %v1326 = vpop.xlane.xlu0 %1325
          %v1328 = vlaneseq
          %v1329 = vshrl.u32 %v1328, 7
          %v1330 = vsub.s32 0, %v1329
          %v1331 = vrot.slane %v1326, %v1330
          %v1332 = vlaneseq
          %v1333 = vshrl.u32 %v1332, 7
          %v1334 = vsub.s32 1, %v1333
          %v1335 = vrot.slane %v1326, %v1334
          %v1338 = vrcp.pop %v1331
          %v1339 = vmul.f32 %v1303, %v1338
          %v1340 = vrcp.pop %v1335
          %v1341 = vmul.f32 %v1305, %v1340
          %1343 = vset.pattern.permute.xlu0 0
          %1344 = vperm.xlu0 %1343, %v1339
          %v1345 = vpop.permute.xlu0 %1344
          %1348 = vset.pattern.permute.xlu0 0
          %1349 = vperm.xlu0 %1348, %v1341
          %v1350 = vpop.permute.xlu0 %1349
          %v1352 = vmul.f32 %v1345, %v1051
          %v1353 = vmul.f32 %v1350, %v1052
          %v1354 = vsel %vm860, %v1352, 0.0
          %v1355 = vrot.slane %v1354, 4
          %v1356 = vadd.f32 %v1354, %v1355
          %v1357 = vrot.slane %v1356, 2
          %v1358 = vadd.f32 %v1356, %v1357
          %v1359 = vrot.slane %v1358, 1
          %v1360 = vadd.f32 %v1358, %v1359
          %v1361 = vsel %vm860, %v1353, 0.0
          %v1362 = vrot.slane %v1361, 4
          %v1363 = vadd.f32 %v1361, %v1362
          %v1364 = vrot.slane %v1363, 2
          %v1365 = vadd.f32 %v1363, %v1364
          %v1366 = vrot.slane %v1365, 1
          %v1367 = vadd.f32 %v1365, %v1366
          %v1368 = vlaneseq
          %v1369 = vshrl.u32 %v1368, 7
          %v1370 = vsub.s32 %v1273, %v1369
          %v1371 = vrot.slane %v1345, %v1370
          %v1372 = vlaneseq
          %v1373 = vshrl.u32 %v1372, 7
          %v1374 = vsub.s32 %v1273, %v1373
          %v1375 = vrot.slane %v1350, %v1374
          %v1376 = vsel %vm1282, %v1375, %v1371
          %v1378 = vadd.f32 %v1053, %v1376
          %v1379 = vld [vmem:[%s19] sm:$0xff]
          %v1380 = vld [vmem:[%s19 + $0x8] sm:$0xff]
          %v1381 = vld [vmem:[%s20] sm:$0xff]
          %v1382 = vld [vmem:[%s20 + $0x8] sm:$0xff]
          %v1383 = vld [vmem:[%s20 + $0x10] sm:$0xff]
          %v1384 = vld [vmem:[%s20 + $0x18] sm:$0xff]
          %v1386 = vsel %vm860, %v838, 0
          %1388 = vmatprep.subr.mxu0 0.0
          %1389 = vmatpush1.msra.mxu0 %v1381
          %1390 = vmatprep.subr.mxu0 0.0
          %1391 = vmatpush1.msra.mxu0 %v1382
          %1392 = vmatprep.subr.mxu0 0.0
          %1393 = vmatpush1.msra.mxu0 %v1383
          %1394 = vmatprep.subr.mxu0 0.0
          %1395 = vmatpush1.msra.mxu0 %v1384
          %1396 = vmatprep.subr.mxu0 0.0
          %1397 = vmatpush1.msra.mxu0 0.0
          %1398 = vmatprep.subr.mxu0 0.0
          %1399 = vmatpush1.msra.mxu0 0.0
          %1400 = vmatprep.subr.mxu0 0.0
          %1401 = vmatpush1.msra.mxu0 0.0
          %1402 = vmatprep.subr.mxu0 0.0
          %1403 = vmatpush1.msra.mxu0 0.0
          %1404 = vmatprep.subr.mxu0 0.0
          %1405 = vmatpush1.msra.mxu0 0.0
          %1406 = vmatprep.subr.mxu0 0.0
          %1407 = vmatpush1.msra.mxu0 0.0
          %1408 = vmatprep.subr.mxu0 0.0
          %1409 = vmatpush1.msra.mxu0 0.0
          %1410 = vmatprep.subr.mxu0 0.0
          %1411 = vmatpush1.msra.mxu0 0.0
          %1412 = vmatprep.subr.mxu0 0.0
          %1413 = vmatpush1.msra.mxu0 0.0
          %1414 = vmatprep.subr.mxu0 0.0
          %1415 = vmatpush1.msra.mxu0 0.0
          %1416 = vmatprep.subr.mxu0 0.0
          %1417 = vmatpush1.msra.mxu0 0.0
          %1418 = vmatprep.subr.mxu0 0.0
          %1419 = vmatpush1.msra.mxu0 0.0
          %1420 = vmatprep.subr.mxu0 0.0
          %1421 = vmatpush1.msra.mxu0 0.0
          %1422 = vmatprep.subr.mxu0 0.0
          %1423 = vmatpush1.msra.mxu0 0.0
          %1424 = vmatprep.subr.mxu0 0.0
          %1425 = vmatpush1.msra.mxu0 0.0
          %1426 = vmatprep.subr.mxu0 0.0
          %1427 = vmatpush1.msra.mxu0 0.0
          %1428 = vmatprep.subr.mxu0 0.0
          %1429 = vmatpush1.msra.mxu0 0.0
          %1430 = vmatprep.subr.mxu0 0.0
          %1431 = vmatpush1.msra.mxu0 0.0
          %1432 = vmatprep.subr.mxu0 0.0
          %1433 = vmatpush1.msra.mxu0 0.0
          %1434 = vmatprep.subr.mxu0 0.0
          %1435 = vmatpush1.msra.mxu0 0.0
          %1436 = vmatprep.subr.mxu0 0.0
          %1437 = vmatpush1.msra.mxu0 0.0
          %1438 = vmatprep.subr.mxu0 0.0
          %1439 = vmatpush1.msra.mxu0 0.0
          %1440 = vmatprep.subr.mxu0 0.0
          %1441 = vmatpush1.msra.mxu0 0.0
          %1442 = vmatprep.subr.mxu0 0.0
          %1443 = vmatpush1.msra.mxu0 0.0
          %1444 = vmatprep.subr.mxu0 0.0
          %1445 = vmatpush1.msra.mxu0 0.0
          %1446 = vmatprep.subr.mxu0 0.0
          %1447 = vmatpush1.msra.mxu0 0.0
          %1448 = vmatprep.subr.mxu0 0.0
          %1449 = vmatpush1.msra.mxu0 0.0
          %1450 = vmatprep.subr.mxu0 0.0
          %1451 = vmatpush1.msra.mxu0 0.0
          %1452 = vmatprep.mubr.f32.mxu0 0.0
          %1453 = vmatmul.mubr.f32.gmra.mrb[0].mxu0 %v1386
          %v1454 = vpop.f32.mrb[0].mxu0
          %v1455 = vadd.f32 0.0, %v1454
          %v1456 = vpop.f32.mrb[0].mxu0
          %1457 = vdwg.mxu0
          %v1459 = vsel %vm910, %v836, 0
          %1461 = vmatprep.subr.mxu0 0.0
          %1462 = vmatpush1.msra.mxu0 %v1379
          %1463 = vmatprep.subr.mxu0 0.0
          %1464 = vmatpush1.msra.mxu0 %v1380
          %1465 = vmatprep.subr.mxu0 0.0
          %1466 = vmatpush1.msra.mxu0 0.0
          %1467 = vmatprep.subr.mxu0 0.0
          %1468 = vmatpush1.msra.mxu0 0.0
          %1469 = vmatprep.subr.mxu0 0.0
          %1470 = vmatpush1.msra.mxu0 0.0
          %1471 = vmatprep.subr.mxu0 0.0
          %1472 = vmatpush1.msra.mxu0 0.0
          %1473 = vmatprep.subr.mxu0 0.0
          %1474 = vmatpush1.msra.mxu0 0.0
          %1475 = vmatprep.subr.mxu0 0.0
          %1476 = vmatpush1.msra.mxu0 0.0
          %1477 = vmatprep.subr.mxu0 0.0
          %1478 = vmatpush1.msra.mxu0 0.0
          %1479 = vmatprep.subr.mxu0 0.0
          %1480 = vmatpush1.msra.mxu0 0.0
          %1481 = vmatprep.subr.mxu0 0.0
          %1482 = vmatpush1.msra.mxu0 0.0
          %1483 = vmatprep.subr.mxu0 0.0
          %1484 = vmatpush1.msra.mxu0 0.0
          %1485 = vmatprep.subr.mxu0 0.0
          %1486 = vmatpush1.msra.mxu0 0.0
          %1487 = vmatprep.subr.mxu0 0.0
          %1488 = vmatpush1.msra.mxu0 0.0
          %1489 = vmatprep.subr.mxu0 0.0
          %1490 = vmatpush1.msra.mxu0 0.0
          %1491 = vmatprep.subr.mxu0 0.0
          %1492 = vmatpush1.msra.mxu0 0.0
          %1493 = vmatprep.subr.mxu0 0.0
          %1494 = vmatpush1.msra.mxu0 0.0
          %1495 = vmatprep.subr.mxu0 0.0
          %1496 = vmatpush1.msra.mxu0 0.0
          %1497 = vmatprep.subr.mxu0 0.0
          %1498 = vmatpush1.msra.mxu0 0.0
          %1499 = vmatprep.subr.mxu0 0.0
          %1500 = vmatpush1.msra.mxu0 0.0
          %1501 = vmatprep.subr.mxu0 0.0
          %1502 = vmatpush1.msra.mxu0 0.0
          %1503 = vmatprep.subr.mxu0 0.0
          %1504 = vmatpush1.msra.mxu0 0.0
          %1505 = vmatprep.subr.mxu0 0.0
          %1506 = vmatpush1.msra.mxu0 0.0
          %1507 = vmatprep.subr.mxu0 0.0
          %1508 = vmatpush1.msra.mxu0 0.0
          %1509 = vmatprep.subr.mxu0 0.0
          %1510 = vmatpush1.msra.mxu0 0.0
          %1511 = vmatprep.subr.mxu0 0.0
          %1512 = vmatpush1.msra.mxu0 0.0
          %1513 = vmatprep.subr.mxu0 0.0
          %1514 = vmatpush1.msra.mxu0 0.0
          %1515 = vmatprep.subr.mxu0 0.0
          %1516 = vmatpush1.msra.mxu0 0.0
          %1517 = vmatprep.subr.mxu0 0.0
          %1518 = vmatpush1.msra.mxu0 0.0
          %1519 = vmatprep.subr.mxu0 0.0
          %1520 = vmatpush1.msra.mxu0 0.0
          %1521 = vmatprep.subr.mxu0 0.0
          %1522 = vmatpush1.msra.mxu0 0.0
          %1523 = vmatprep.subr.mxu0 0.0
          %1524 = vmatpush1.msra.mxu0 0.0
          %1525 = vmatprep.mubr.f32.mxu0 0.0
          %1526 = vmatmul.mubr.f32.gmra.mrb[0].mxu0 %v1459
          %v1527 = vpop.f32.mrb[0].mxu0
          %v1528 = vadd.f32 %v1455, %v1527
          %v1529 = vpop.f32.mrb[0].mxu0
          %1530 = vdwg.mxu0
          %v1531 = vld [vmem:[#allocation9] sm:$0x1]
          %v1533 = vlaneseq
          %v1534 = vshrl.u32 %v1533, 7
          %v1535 = vsub.s32 0, %v1534
          %v1536 = vrot.slane %v1531, %v1535
          %v1538 = vadd.f32 %v1528, %v1536
          %v1539 = vxor.u32 %v1538, 2147483648
          %v1540 = vmul.f32 %v1539, 1.442695
          %v1541 = vpow.pop %v1540
          %v1542 = vadd.f32 %v1541, 1.0
          %v1543 = vrcp.pop %v1542
          %v1544 = vmul.f32 1.0, %v1543
          %v1547 = vsel %vm1282, %v1367, %v1360
          %vm1549 = vcmask 254976
          %1550 = vst.msk [vmem:[#allocation3] sm:$0x3] %vm1549, %v1547
          %1551 = vst.msk [vmem:[#allocation4] sm:$0x3] %vm1285, %v1376
          %vm1552 = vcmask 1024
          %1553 = vst.msk [vmem:[#allocation5] sm:$0x3] %vm1552, %v1544
          %1554 = vst [vmem:[%s23] sm:$0xff] 0.0
          %1555 = vst [vmem:[%s23 + $0x8] sm:$0x3] 0.0
          %v1558 = vunpack.c.l.s4 1983009808
          %v1559 = vunpack.c.0.s8 %v1558
          %v1560 = vlaneseq
          %v1561 = vshrl.u32 %v1560, 7
          %v1562 = vsub.s32 %v1559, %v1561
          %v1563 = vrot.slane %v1050, %v1562
          %1564 = vrot.lane.b32.xlu0 %v1563, 32
          %v1565 = vpop.permute.xlu0 %1564
          %1567 = vst.msk [vmem:[%s23] sm:$0x3] %vm1549, %v1565
          %v1570 = vunpack.c.l.s4 1983009808
          %v1571 = vunpack.c.0.s8 %v1570
          %v1572 = vlaneseq
          %v1573 = vshrl.u32 %v1572, 7
          %v1574 = vsub.s32 %v1571, %v1573
          %v1575 = vrot.slane %v1044, %v1574
          %1576 = vrot.lane.b32.xlu0 %v1575, 96
          %v1577 = vpop.permute.xlu0 %1576
          %1579 = vst.msk [vmem:[%s23 + $0x2] sm:$0x3] %vm1549, %v1577
          %v1581 = vunpack.c.l.s4 1983009808
          %v1582 = vunpack.c.0.s8 %v1581
          %v1583 = vlaneseq
          %v1584 = vshrl.u32 %v1583, 7
          %v1585 = vsub.s32 %v1582, %v1584
          %v1586 = vrot.slane %v1360, %v1585
          %v1588 = vunpack.c.l.s4 1983009808
          %v1589 = vunpack.c.0.s8 %v1588
          %v1590 = vlaneseq
          %v1591 = vshrl.u32 %v1590, 7
          %v1592 = vsub.s32 %v1589, %v1591
          %v1593 = vrot.slane %v1367, %v1592
          %vm1594 = vcmask 1044484
          %v1595 = vsel %vm1594, %v1586, %v1586
          %vm1596 = vcmask 1046534
          %v1597 = vsel %vm1596, %v1586, %v1595
          %v1598 = vrot.slane %v1593, 7
          %v1599 = vsel %vm1282, %v1598, %v1597
          %vm1600 = vcmask 1043459
          %v1601 = vsel %vm1600, %v1598, %v1599
          %vm1602 = vcmask 1045509
          %v1603 = vsel %vm1602, %v1598, %v1601
          %vm1604 = vcmask 1047559
          %v1605 = vsel %vm1604, %v1598, %v1603
          %1607 = vst.msk [vmem:[%s23 + $0x4] sm:$0x3] %vm1549, %v1605
          %v1608 = vcombine.high %v1339, %v1339
          %v1610 = vunpack.c.l.s4 1983009808
          %v1611 = vunpack.c.0.s8 %v1610
          %v1612 = vlaneseq
          %v1613 = vshrl.u32 %v1612, 7
          %v1614 = vsub.s32 %v1611, %v1613
          %v1615 = vrot.slane %v1339, %v1614
          %v1617 = vunpack.c.l.s4 1983009808
          %v1618 = vunpack.c.0.s8 %v1617
          %v1619 = vlaneseq
          %v1620 = vshrl.u32 %v1619, 7
          %v1621 = vsub.s32 %v1618, %v1620
          %v1622 = vrot.slane %v1608, %v1621
          %v1623 = vcombine.high %v1615, %v1615
          %v1624 = vcombine.high %v1622, %v1622
          %v1625 = vcombine.high %v1341, %v1341
          %v1627 = vunpack.c.l.s4 1983009808
          %v1628 = vunpack.c.0.s8 %v1627
          %v1629 = vlaneseq
          %v1630 = vshrl.u32 %v1629, 7
          %v1631 = vsub.s32 %v1628, %v1630
          %v1632 = vrot.slane %v1341, %v1631
          %v1634 = vunpack.c.l.s4 1983009808
          %v1635 = vunpack.c.0.s8 %v1634
          %v1636 = vlaneseq
          %v1637 = vshrl.u32 %v1636, 7
          %v1638 = vsub.s32 %v1635, %v1637
          %v1639 = vrot.slane %v1625, %v1638
          %v1640 = vcombine.high %v1632, %v1632
          %v1641 = vcombine.high %v1639, %v1639
          %v1642 = vcombine.low %v1615, %v1623
          %v1643 = vcombine.low %v1622, %v1624
          %v1645 = vunpack.c.l.s4 1983009808
          %v1646 = vunpack.c.0.s8 %v1645
          %v1647 = vlaneseq
          %v1648 = vshrl.u32 %v1647, 7
          %v1649 = vsub.s32 %v1646, %v1648
          %v1650 = vrot.slane %v1642, %v1649
          %v1652 = vunpack.c.l.s4 1983009808
          %v1653 = vunpack.c.0.s8 %v1652
          %v1654 = vlaneseq
          %v1655 = vshrl.u32 %v1654, 7
          %v1656 = vsub.s32 %v1653, %v1655
          %v1657 = vrot.slane %v1643, %v1656
          %v1658 = vcombine.low %v1650, %v1657
          %v1659 = vcombine.low %v1632, %v1640
          %v1660 = vcombine.low %v1639, %v1641
          %v1662 = vunpack.c.l.s4 1983009808
          %v1663 = vunpack.c.0.s8 %v1662
          %v1664 = vlaneseq
          %v1665 = vshrl.u32 %v1664, 7
          %v1666 = vsub.s32 %v1663, %v1665
          %v1667 = vrot.slane %v1659, %v1666
          %v1669 = vunpack.c.l.s4 1983009808
          %v1670 = vunpack.c.0.s8 %v1669
          %v1671 = vlaneseq
          %v1672 = vshrl.u32 %v1671, 7
          %v1673 = vsub.s32 %v1670, %v1672
          %v1674 = vrot.slane %v1660, %v1673
          %v1675 = vcombine.low %v1667, %v1674
          %1676 = vset.pattern.permute.xlu0 0
          %1677 = vperm.xlu0 %1676, %v1658
          %v1678 = vpop.permute.xlu0 %1677
          %1679 = vset.pattern.permute.xlu0 0
          %1680 = vperm.xlu0 %1679, %v1675
          %v1681 = vpop.permute.xlu0 %1680
          %v1682 = vlaneseq
          %v1683 = vshrl.u32 %v1682, 7
          %v1684 = vsub.s32 %v1273, %v1683
          %v1685 = vrot.slane %v1678, %v1684
          %v1686 = vlaneseq
          %v1687 = vshrl.u32 %v1686, 7
          %v1688 = vsub.s32 %v1273, %v1687
          %v1689 = vrot.slane %v1681, %v1688
          %v1690 = vsel %vm1282, %v1689, %v1685
          %v1692 = vunpack.c.l.s4 1983009808
          %v1693 = vunpack.c.0.s8 %v1692
          %v1694 = vlaneseq
          %v1695 = vshrl.u32 %v1694, 7
          %v1696 = vsub.s32 %v1693, %v1695
          %v1697 = vrot.slane %v1690, %v1696
          %1699 = vst.msk [vmem:[%s23 + $0x6] sm:$0x3] %vm1285, %v1697
          %1700 = vst.msk [vmem:[%s23 + $0x8] sm:$0x3] %vm1285, %v1378
        $region145: #{attention_decoder_forward.1} parent=136 // pred_fallthru
          _
        %v1701 = vld [vmem:[#allocation3] sm:$0x3]
        %v1702 = vpack.c.bf16 %v1701, %v1701
        %v1703 = vld [vmem:[%s667] sm:$0xf]
        %v1704 = vld [vmem:[%s667 + $0x4] sm:$0xf]
        %v1705 = vld [vmem:[%s667 + $0x8] sm:$0xf]
        %v1706 = vld [vmem:[%s667 + $0xc] sm:$0xf]
        %v1707 = vld [vmem:[%s729] sm:$0x1]
        %v1709 = vlaneseq
        %v1710 = vshrl.u32 %v1709, 7
        %v1711 = vsub.s32 0, %v1710
        %v1712 = vrot.slane %v1707, %v1711
        %v1718 = vunpack.c.l.b16 %v1703
        %v1719 = vunpack.c.l.b16 %v1704
        %v1720 = vunpack.c.l.b16 %v1705
        %v1721 = vunpack.c.l.b16 %v1706
        %v1722 = vpack.c.b16 %v1719, %v1718
        %v1723 = vpack.c.b16 %v1721, %v1720
        %vm1726 = vcmask 261120
        %v1728 = vsel %vm1726, %v1702, 0
        %1730 = vmatprep.subr.bf16.mxu0 0
        %1731 = vmatpush1.bf16.msra.mxu0 %v1722
        %1732 = vmatprep.subr.bf16.mxu0 0
        %1733 = vmatpush1.bf16.msra.mxu0 %v1723
        %1734 = vmatprep.subr.bf16.mxu0 0
        %1735 = vmatpush1.bf16.msra.mxu0 0
        %1736 = vmatprep.subr.bf16.mxu0 0
        %1737 = vmatpush1.bf16.msra.mxu0 0
        %1738 = vmatprep.subr.bf16.mxu0 0
        %1739 = vmatpush1.bf16.msra.mxu0 0
        %1740 = vmatprep.subr.bf16.mxu0 0
        %1741 = vmatpush1.bf16.msra.mxu0 0
        %1742 = vmatprep.subr.bf16.mxu0 0
        %1743 = vmatpush1.bf16.msra.mxu0 0
        %1744 = vmatprep.subr.bf16.mxu0 0
        %1745 = vmatpush1.bf16.msra.mxu0 0
        %1746 = vmatprep.subr.bf16.mxu0 0
        %1747 = vmatpush1.bf16.msra.mxu0 0
        %1748 = vmatprep.subr.bf16.mxu0 0
        %1749 = vmatpush1.bf16.msra.mxu0 0
        %1750 = vmatprep.subr.bf16.mxu0 0
        %1751 = vmatpush1.bf16.msra.mxu0 0
        %1752 = vmatprep.subr.bf16.mxu0 0
        %1753 = vmatpush1.bf16.msra.mxu0 0
        %1754 = vmatprep.subr.bf16.mxu0 0
        %1755 = vmatpush1.bf16.msra.mxu0 0
        %1756 = vmatprep.subr.bf16.mxu0 0
        %1757 = vmatpush1.bf16.msra.mxu0 0
        %1758 = vmatprep.subr.bf16.mxu0 0
        %1759 = vmatpush1.bf16.msra.mxu0 0
        %1760 = vmatprep.subr.bf16.mxu0 0
        %1761 = vmatpush1.bf16.msra.mxu0 0
        %1762 = vmatprep.mubr.bf16.mxu0 0
        %1763 = vmatmul.mubr.bf16.gmra.mrb[0].mxu0 %v1728
        %v1764 = vpop.f32.mrb[0].mxu0
        %v1765 = vadd.f32 %v1712, %v1764
        %v1766 = vpop.f32.mrb[0].mxu0
        %v1767 = vpop.f32.mrb[0].mxu0
        %v1768 = vpop.f32.mrb[0].mxu0
        %1769 = vdwg.mxu0
        %s1770 = smul.u32 %s46, 128
        %v1771 = vld [vmem:[%s1] sm:$0x3]
        %v1772 = vlaneseq
        %v1773 = vand.u32 %v1772, 127
        %v1774 = vstv %s1770
        %v1775 = vadd.s32 %v1773, %v1774
        %v1776 = vlaneseq
        %v1777 = vshrl.u32 %v1776, 7
        %v1778 = vsub.s32 0, %v1777
        %v1779 = vrot.slane %v1771, %v1778
        %1781 = vbcast.lane.b32.xlu0 %v1779, 256
        %v1782 = vpop.permute.xlu0 %1781
        %v1783 = vlaneseq
        %v1784 = vshrl.u32 %v1783, 7
        %v1785 = vsub.s32 1, %v1784
        %v1786 = vrot.slane %v1771, %v1785
        %1788 = vbcast.lane.b32.xlu0 %v1786, 256
        %v1789 = vpop.permute.xlu0 %1788
        %vm1790 = vcmp.eq.s32.totalorder %v1782, %v1775
        %vm1791 = vcmp.eq.s32.totalorder %v1789, %v1775
        %v1792 = vld [vmem:[#allocation4] sm:$0x3]
        %v1793 = vlaneseq
        %v1794 = vshrl.u32 %v1793, 7
        %v1795 = vsub.s32 0, %v1794
        %v1796 = vrot.slane %v1792, %v1795
        %1798 = vbcast.lane.b32.xlu0 %v1796, 256
        %v1799 = vpop.permute.xlu0 %1798
        %v1800 = vlaneseq
        %v1801 = vshrl.u32 %v1800, 7
        %v1802 = vsub.s32 1, %v1801
        %v1803 = vrot.slane %v1792, %v1802
        %1805 = vbcast.lane.b32.xlu0 %v1803, 256
        %v1806 = vpop.permute.xlu0 %1805
        %v1807 = vsel %vm1790, %v1799, 0.0
        %v1808 = vsel %vm1791, %v1806, 0.0
        %v1809 = vrot.slane %v1807, 4
        %v1810 = vadd.f32 %v1807, %v1809
        %v1811 = vrot.slane %v1810, 2
        %v1812 = vadd.f32 %v1810, %v1811
        %v1813 = vrot.slane %v1812, 1
        %v1814 = vadd.f32 %v1812, %v1813
        %v1815 = vrot.slane %v1808, 4
        %v1816 = vadd.f32 %v1808, %v1815
        %v1817 = vrot.slane %v1816, 2
        %v1818 = vadd.f32 %v1816, %v1817
        %v1819 = vrot.slane %v1818, 1
        %v1820 = vadd.f32 %v1818, %v1819
        %v1821 = vld [vmem:[#allocation5] sm:$0x3]
        %v1822 = vsub.f32 1.0, %v1821
        %1824 = vset.pattern.permute.xlu0 0
        %1825 = vperm.xlu0 %1824, %v1822
        %v1826 = vpop.permute.xlu0 %1825
        %v1828 = vmul.f32 %v1826, %v1765
        %1830 = vset.pattern.permute.xlu0 0
        %1831 = vperm.xlu0 %1830, %v1821
        %v1832 = vpop.permute.xlu0 %1831
        %vm1836 = vcmask 1041409
        %v1837 = vsel %vm1836, %v1820, %v1814
        %v1839 = vmul.f32 %v1832, %v1837
        %v1840 = vadd.f32 %v1828, %v1839
        %1841 = vst [vmem:[%s724] sm:$0x3] %v1840
        %s1842 = sand.u32 %s484, 1
        %s1843 = scalar_lea.sflag [#allocation12], %s1842
        %s1844 = sand.u32 %s484, 1
        %s1845 = smul.addr %s1844, 2
        %s1846 = scalar_lea.vmem [#allocation11], %s1845
        // Predicated region
        $region206: #{attention_decoder_forward.1} parent=136 // pred_check
          %p1847 = pneg %p494
        $region207: #{attention_decoder_forward.1} parent=136 // pred_check_branch
          %1849 = sbr.rel (%p1847) target = $region209
        $region208: #{attention_decoder_forward.1} parent=136 // pred_region
          %s1851 = ssub.s32 32, 32
          %1852 = vsyncadd %s1843, %s1851
          %s1853 = smul.addr %s46, 32
          %s1854 = scalar_lea.hbm %s22, %s1853
          %s1856 = sshll.u32 %s1846, 4
          %s1857 = int_to_ptr.vmem [resolvable:$true] %s1856
          %1859 = dma.vmem_to_hbm [thread:$0]  %s1857, 32, %s1854, %s1843
        $region209: #{attention_decoder_forward.1} parent=136 // pred_fallthru
          _
        // Predicated region
        $region210: #{attention_decoder_forward.1} parent=136 // pred_check
          %p1860 = pneg %p515
        $region211: #{attention_decoder_forward.1} parent=136 // pred_check_branch
          %1862 = sbr.rel (%p1860) target = $region213
        $region212: #{attention_decoder_forward.1} parent=136 // pred_region
          _
        $region213: #{attention_decoder_forward.1} parent=136 // pred_fallthru
          _
        // Predicated region
        $region214: #{attention_decoder_forward.1} parent=136 // pred_check
          %p1863 = pneg %p515
        $region215: #{attention_decoder_forward.1} parent=136 // pred_check_branch
          %1865 = sbr.rel (%p1863) target = $region217
        $region216: #{attention_decoder_forward.1} parent=136 // pred_region
          _
        $region217: #{attention_decoder_forward.1} parent=136 // pred_fallthru
          _
      $region137: #{attention_decoder_forward.1} parent=5 // pred_fallthru
        _
      %p1866 = scmp.le.s32.totalorder 2, %s41
      // Predicated region
      $region218: #{attention_decoder_forward.1} parent=5 // pred_check
        %p1867 = pneg %p1866
      $region219: #{attention_decoder_forward.1} parent=5 // pred_check_branch
        %1869 = sbr.rel (%p1867) target = $region221
      $region220: #{attention_decoder_forward.1} parent=5 // pred_region
        %s1870 = ssub.s32 %s41, 2
        // Predicated region
        $region222: #{attention_decoder_forward.1} parent=220 // pred_check
          %p1871 = pneg %p500
        $region223: #{attention_decoder_forward.1} parent=220 // pred_check_branch
          %1873 = sbr.rel (%p1871) target = $region225
        $region224: #{attention_decoder_forward.1} parent=220 // pred_region
          %s1874 = sand.u32 %s485, 1
          %s1875 = scalar_lea.sflag [#allocation12], %s1874
          %s1876 = sand.u32 %s485, 1
          %s1877 = smul.addr %s1876, 2
          %s1878 = scalar_lea.vmem [#allocation11], %s1877
          %1879 = dma.done %s1875, 32
        $region225: #{attention_decoder_forward.1} parent=220 // pred_fallthru
          _
      $region221: #{attention_decoder_forward.1} parent=5 // pred_fallthru
        _
    $region6: #{attention_decoder_forward.1} parent=1 // loop_footer
      %s45 = sadd.s32 1, %s41
    $region7: #{attention_decoder_forward.1} parent=1 // loop_footer_branch
      %40 = sbr.rel target = $region3
    $region8: #{attention_decoder_forward.1} parent=1 // loop_exit
      _
    %1880 = vsyncpa [#allocation12], 1
    %s1881 = scalar_lea.sflag [#allocation12], 1
    %1882 = vsyncpa %s1881, 1
  %1883 = vsyncmov [#allocation6]
  %s1884 = vpop.sfrf %1883
  %p1885 = scmp.eq.s32.totalorder %s1884, 0
  %p1886 = pneg %p1885
  %1888 = shalt.err (%p1886)
  %s1889 = scalar_lea.sflag [#allocation6], 1
  %1890 = vsyncmov %s1889
  %s1891 = vpop.sfrf %1890
  %p1892 = scmp.eq.s32.totalorder %s1891, 0
  %p1893 = pneg %p1892
  %1895 = shalt.err (%p1893)

</llo_original>
